<compile_context>
chip_gen: v7x
topology: tpu7x:2x2x1
jax: 0.10.0
libtpu: 0.0.40
codegen_flags: <defaults>
</compile_context>

<pallas_src>
import functools

import jax
import jax.numpy as jnp
import numpy as np
from jax import lax
from jax.experimental import pallas as pl
from jax.experimental.pallas import tpu as pltpu

LN_EPS = 1e-5  # nn.LayerNorm default
_LANE = 128


def _round_up(n, m):
    return ((n + m - 1) // m) * m


def _fused_patch_embed_kernel(
    xcol_ref,            # (TM, Kp)       bf16 im2col'd patches (zero-padded lanes)
    wp_ref, bp_ref,      # (Kp, midp) bf16, (1, midp) f32     patch_conv
    g1_ref, be1_ref,     # (1, midp) f32                      norm (LayerNorm over mid)
    w1_ref, b1_ref,      # (midp, hidp) bf16, (1, hidp) f32   Mlp.fc1
    w2_ref, b2_ref,      # (hidp, midp) bf16, (1, midp) f32   Mlp.fc2
    we_ref, bbe_ref,     # (midp, outp) bf16, (1, outp) f32   enlarge_conv (1x1)
    g2_ref, be2_ref,     # (1, outp) f32                      norm_enlarge
    out_mid_ref,         # (TM, midp) f32
    out_enl_ref,         # (TM, outp) f32
    *,
    mid_true, out_true,
):
    # --- patch_conv (stride == kernel => matmul on flattened patches), f32 accumulate ---
    h = jnp.dot(xcol_ref[...], wp_ref[...], preferred_element_type=jnp.float32)
    h = h + bp_ref[...]

    # --- self.norm : LayerNorm over the real mid channels.  Padded lanes of h are
    #     exactly 0, so sums over the padded axis equal sums over the real channels;
    #     padded gamma/beta are 0 so padded outputs stay 0.
    inv_mid = jnp.float32(1.0 / mid_true)
    mu = jnp.sum(h, axis=-1, keepdims=True) * inv_mid
    var = jnp.maximum(jnp.sum(h * h, axis=-1, keepdims=True) * inv_mid - mu * mu, 0.0)
    hn = (h - mu) * lax.rsqrt(var + LN_EPS) * g1_ref[...] + be1_ref[...]

    # --- depth_convs = Mlp(mid, 4*mid): fc1 -> GELU (tanh approx -> EUP) -> fc2 ---
    a = jnp.dot(hn.astype(jnp.bfloat16), w1_ref[...],
                preferred_element_type=jnp.float32) + b1_ref[...]
    c0 = jnp.float32(0.7978845608028654)  # sqrt(2/pi)
    c1 = jnp.float32(0.044715)
    a = 0.5 * a * (1.0 + jnp.tanh(c0 * (a + c1 * a * a * a)))
    m = jnp.dot(a.astype(jnp.bfloat16), w2_ref[...],
                preferred_element_type=jnp.float32) + b2_ref[...]
    out_mid_ref[...] = m.astype(out_mid_ref.dtype)

    # --- enlarge_conv (1x1 conv == matmul) + norm_enlarge ---
    e = jnp.dot(m.astype(jnp.bfloat16), we_ref[...],
                preferred_element_type=jnp.float32) + bbe_ref[...]
    inv_out = jnp.float32(1.0 / out_true)
    mu2 = jnp.sum(e, axis=-1, keepdims=True) * inv_out
    var2 = jnp.maximum(jnp.sum(e * e, axis=-1, keepdims=True) * inv_out - mu2 * mu2, 0.0)
    en = (e - mu2) * lax.rsqrt(var2 + LN_EPS) * g2_ref[...] + be2_ref[...]
    out_enl_ref[...] = en.astype(out_enl_ref.dtype)


def patch_embed_conv_pallas(x, params, patch_size=2, tm=256):
    """Forward of PatchEmbedConv (scale_rate > 1 path).

    x: (B, C, H, W) float32, NCHW.
    Returns (x_mid, x_enlarged) as (B, mid, Wh, Ww) and (B, out, Wh, Ww).
    """
    B, C, H, W = x.shape
    p = patch_size
    # F.pad semantics: zero-pad right of W / bottom of H when not divisible.
    if W % p != 0:
        x = jnp.pad(x, ((0, 0), (0, 0), (0, 0), (0, p - W % p)))
    if H % p != 0:
        x = jnp.pad(x, ((0, 0), (0, 0), (0, p - H % p), (0, 0)))
    _, _, H, W = x.shape
    Wh, Ww = H // p, W // p

    # im2col (glue): (B,C,H,W) -> (N, C*p*p), patch flattened in (C, kh, kw) order.
    # TODO(synk): for a downstream NHWC/token-major consumer, the trailing NCHW
    # transposes (and this one) could be dropped to save one HBM pass each.
    xcol = x.reshape(B, C, Wh, p, Ww, p).transpose(0, 2, 4, 1, 3, 5).reshape(
        B * Wh * Ww, C * p * p)

    K = C * p * p
    mid = params["wp"].shape[1]
    hid = params["w1"].shape[1]
    out = params["we"].shape[1]
    N = B * Wh * Ww

    # Lane-dense padded sizes (multiples of 128) and token padding (multiple of tm).
    Kp = _round_up(K, _LANE)
    midp = _round_up(mid, _LANE)
    hidp = _round_up(hid, _LANE)
    outp = _round_up(out, _LANE)
    Np = _round_up(N, tm)

    xcol = jnp.pad(xcol, ((0, Np - N), (0, Kp - K))).astype(jnp.bfloat16)

    def pad2(a, r, c):
        return jnp.pad(a, ((0, r - a.shape[0]), (0, c - a.shape[1])))

    def padrow(v, c):
        return jnp.pad(v.reshape(1, -1), ((0, 0), (0, c - v.shape[0])))

    f32, bf16 = jnp.float32, jnp.bfloat16
    wvecs = [
        pad2(params["wp"], Kp, midp).astype(bf16),   padrow(params["bp"], midp).astype(f32),
        padrow(params["g1"], midp).astype(f32),      padrow(params["be1"], midp).astype(f32),
        pad2(params["w1"], midp, hidp).astype(bf16), padrow(params["b1"], hidp).astype(f32),
        pad2(params["w2"], hidp, midp).astype(bf16), padrow(params["b2"], midp).astype(f32),
        pad2(params["we"], midp, outp).astype(bf16), padrow(params["bbe"], outp).astype(f32),
        padrow(params["g2"], outp).astype(f32),      padrow(params["be2"], outp).astype(f32),
    ]

    tok_spec = lambda d: pl.BlockSpec((tm, d), lambda i: (i, 0))
    full_spec = lambda a: pl.BlockSpec(a.shape, lambda i: (0, 0))  # grid-invariant

    kernel = functools.partial(_fused_patch_embed_kernel, mid_true=mid, out_true=out)

    out_mid, out_enl = pl.pallas_call(
        kernel,
        grid=(Np // tm,),
        in_specs=[tok_spec(Kp)] + [full_spec(w) for w in wvecs],
        out_specs=[tok_spec(midp), tok_spec(outp)],
        out_shape=(
            jax.ShapeDtypeStruct((Np, midp), jnp.float32),
            jax.ShapeDtypeStruct((Np, outp), jnp.float32),
        ),
        compiler_params=pltpu.CompilerParams(
            dimension_semantics=("parallel",),
            vmem_limit_bytes=32 * 1024 * 1024,
        ),
    )(xcol, *wvecs)

    # Slice off token/lane padding and go back to NCHW
    # (matches x.transpose(1,2).view(-1, ch, Wh, Ww) in the module).
    x_mid = out_mid[:N, :mid].reshape(B, Wh, Ww, mid).transpose(0, 3, 1, 2)
    x_enl = out_enl[:N, :out].reshape(B, Wh, Ww, out).transpose(0, 3, 1, 2)
    return x_mid, x_enl


def _reference(x, params, patch_size=2):
    """Pure-JAX f32 reference (exact-erf GELU, torch semantics) for correctness."""
    B, C, H, W = x.shape
    p = patch_size
    if W % p != 0:
        x = jnp.pad(x, ((0, 0), (0, 0), (0, 0), (0, p - W % p)))
    if H % p != 0:
        x = jnp.pad(x, ((0, 0), (0, 0), (0, p - H % p), (0, 0)))
    _, _, H, W = x.shape
    Wh, Ww = H // p, W // p
    xcol = x.reshape(B, C, Wh, p, Ww, p).transpose(0, 2, 4, 1, 3, 5).reshape(
        B * Wh * Ww, C * p * p)
    h = xcol @ params["wp"] + params["bp"]

    def ln(v, g, b):
        mu = v.mean(-1, keepdims=True)
        var = ((v - mu) ** 2).mean(-1, keepdims=True)
        return (v - mu) / jnp.sqrt(var + LN_EPS) * g + b

    hn = ln(h, params["g1"], params["be1"])
    a = hn @ params["w1"] + params["b1"]
    a = 0.5 * a * (1.0 + lax.erf(a / jnp.sqrt(2.0)))
    m = a @ params["w2"] + params["b2"]
    e = m @ params["we"] + params["bbe"]
    en = ln(e, params["g2"], params["be2"])
    x_mid = m.reshape(B, Wh, Ww, -1).transpose(0, 3, 1, 2)
    x_enl = en.reshape(B, Wh, Ww, -1).transpose(0, 3, 1, 2)
    return x_mid, x_enl


def make_params(key, in_chans, mid_chans, hidden, out_chans, patch_size):
    """Deterministic synthetic parameters (shapes follow the module __init__)."""
    ks = jax.random.split(key, 8)
    K = in_chans * patch_size * patch_size
    s = 0.02
    # patch_conv weight is (mid, C, p, p) in torch; flatten to (mid, C*p*p) then transpose.
    wp_t = jax.random.normal(ks[0], (mid_chans, in_chans, patch_size, patch_size), jnp.float32) * s
    return {
        "wp": wp_t.reshape(mid_chans, K).T,
        "bp": jax.random.normal(ks[1], (mid_chans,), jnp.float32) * s,
        "g1": jnp.ones((mid_chans,), jnp.float32),
        "be1": jnp.zeros((mid_chans,), jnp.float32),
        "w1": jax.random.normal(ks[2], (mid_chans, hidden), jnp.float32) * s,
        "b1": jax.random.normal(ks[3], (hidden,), jnp.float32) * s,
        "w2": jax.random.normal(ks[4], (hidden, mid_chans), jnp.float32) * s,
        "b2": jax.random.normal(ks[5], (mid_chans,), jnp.float32) * s,
        "we": jax.random.normal(ks[6], (mid_chans, out_chans), jnp.float32) * s,  # 1x1 conv
        "bbe": jax.random.normal(ks[7], (out_chans,), jnp.float32) * s,
        "g2": jnp.ones((out_chans,), jnp.float32),
        "be2": jnp.zeros((out_chans,), jnp.float32),
    }


if __name__ == "__main__":
    # patch_size=2, depth=1, scale_rate=2 (exercises enlarge_conv + norm_enlarge).
    B, C, H, W = 2, 4, 16, 16
    patch_size = 2
    mid_chans, out_chans = 32, 64
    hidden = 4 * mid_chans

    key = jax.random.PRNGKey(0)
    kx, kp, kx2 = jax.random.split(key, 3)
    x = jax.random.normal(kx, (B, C, H, W), jnp.float32)
    params = make_params(kp, C, mid_chans, hidden, out_chans, patch_size)

    fwd = jax.jit(functools.partial(patch_embed_conv_pallas, patch_size=patch_size, tm=256))

    # --- main check (divisible H/W) ---
    x_mid, x_enl = fwd(x, params)
    jax.block_until_ready((x_mid, x_enl))
    ref_mid, ref_enl = _reference(x, params, patch_size=patch_size)
    # bf16 matmul inputs + tanh-GELU vs exact erf => loosened tolerances.
    np.testing.assert_allclose(np.asarray(x_mid), np.asarray(ref_mid), atol=2e-2, rtol=2e-2)
    np.testing.assert_allclose(np.asarray(x_enl), np.asarray(ref_enl), atol=2e-2, rtol=2e-2)
    assert x_mid.shape == (B, mid_chans, H // patch_size, W // patch_size)
    assert x_enl.shape == (B, out_chans, H // patch_size, W // patch_size)

    # --- non-divisible H/W (exercises the F.pad path and the padded token tail) ---
    H2, W2 = 15, 13
    x2 = jax.random.normal(kx2, (B, C, H2, W2), jnp.float32)
    x_mid2, x_enl2 = fwd(x2, params)
    jax.block_until_ready((x_mid2, x_enl2))
    ref_mid2, ref_enl2 = _reference(x2, params, patch_size=patch_size)
    np.testing.assert_allclose(np.asarray(x_mid2), np.asarray(ref_mid2), atol=2e-2, rtol=2e-2)
    np.testing.assert_allclose(np.asarray(x_enl2), np.asarray(ref_enl2), atol=2e-2, rtol=2e-2)
    assert x_mid2.shape == (B, mid_chans, (H2 + 1) // patch_size, (W2 + 1) // patch_size)
    assert x_enl2.shape == (B, out_chans, (H2 + 1) // patch_size, (W2 + 1) // patch_size)

    print("KERNEL_OK")
</pallas_src>

<mosaic_0001>
module attributes {stable_mosaic.version = 11 : i64} {
  func.func @_fused_patch_embed_kernel(%arg0: i32, %arg1: memref<256x128xbf16, #tpu.memory_space<vmem>>, %arg2: memref<128x128xbf16, #tpu.memory_space<vmem>>, %arg3: memref<1x128xf32, #tpu.memory_space<vmem>>, %arg4: memref<1x128xf32, #tpu.memory_space<vmem>>, %arg5: memref<1x128xf32, #tpu.memory_space<vmem>>, %arg6: memref<128x128xbf16, #tpu.memory_space<vmem>>, %arg7: memref<1x128xf32, #tpu.memory_space<vmem>>, %arg8: memref<128x128xbf16, #tpu.memory_space<vmem>>, %arg9: memref<1x128xf32, #tpu.memory_space<vmem>>, %arg10: memref<128x128xbf16, #tpu.memory_space<vmem>>, %arg11: memref<1x128xf32, #tpu.memory_space<vmem>>, %arg12: memref<1x128xf32, #tpu.memory_space<vmem>>, %arg13: memref<1x128xf32, #tpu.memory_space<vmem>>, %arg14: memref<256x128xf32, #tpu.memory_space<vmem>>, %arg15: memref<256x128xf32, #tpu.memory_space<vmem>>) attributes {dimension_semantics = [#tpu.dimension_semantics<parallel>], iteration_bounds = array<i64: 1>, scalar_prefetch = 0 : i64, scratch_operands = 0 : i64, tpu.core_type = #tpu.core_type<tc>, window_params = [{transform_indices = @transform_0, window_bounds = array<i64: 256, 128>}, {pipeline_mode = #tpu.pipeline_mode<synchronous>, transform_indices = @transform_1, window_bounds = array<i64: 128, 128>}, {pipeline_mode = #tpu.pipeline_mode<synchronous>, transform_indices = @transform_2, window_bounds = array<i64: 1, 128>}, {pipeline_mode = #tpu.pipeline_mode<synchronous>, transform_indices = @transform_3, window_bounds = array<i64: 1, 128>}, {pipeline_mode = #tpu.pipeline_mode<synchronous>, transform_indices = @transform_4, window_bounds = array<i64: 1, 128>}, {pipeline_mode = #tpu.pipeline_mode<synchronous>, transform_indices = @transform_5, window_bounds = array<i64: 128, 128>}, {pipeline_mode = #tpu.pipeline_mode<synchronous>, transform_indices = @transform_6, window_bounds = array<i64: 1, 128>}, {pipeline_mode = #tpu.pipeline_mode<synchronous>, transform_indices = @transform_7, window_bounds = array<i64: 128, 128>}, {pipeline_mode = #tpu.pipeline_mode<synchronous>, transform_indices = @transform_8, window_bounds = array<i64: 1, 128>}, {pipeline_mode = #tpu.pipeline_mode<synchronous>, transform_indices = @transform_9, window_bounds = array<i64: 128, 128>}, {pipeline_mode = #tpu.pipeline_mode<synchronous>, transform_indices = @transform_10, window_bounds = array<i64: 1, 128>}, {pipeline_mode = #tpu.pipeline_mode<synchronous>, transform_indices = @transform_11, window_bounds = array<i64: 1, 128>}, {pipeline_mode = #tpu.pipeline_mode<synchronous>, transform_indices = @transform_12, window_bounds = array<i64: 1, 128>}, {transform_indices = @transform_13, window_bounds = array<i64: 256, 128>}, {transform_indices = @transform_14, window_bounds = array<i64: 256, 128>}]} {
    %c0 = arith.constant 0 : index
    %c0_0 = arith.constant 0 : index
    %0 = vector.load %arg1[%c0, %c0_0] : memref<256x128xbf16, #tpu.memory_space<vmem>>, vector<256x128xbf16>
    %c0_1 = arith.constant 0 : index
    %c0_2 = arith.constant 0 : index
    %1 = vector.load %arg2[%c0_1, %c0_2] : memref<128x128xbf16, #tpu.memory_space<vmem>>, vector<128x128xbf16>
    %cst = arith.constant dense<0.000000e+00> : vector<256x128xf32>
    %2 = tpu.matmul %0, %1, %cst {dimension_numbers = #tpu.dot_dimension_numbers<[1], [0], [0], [1], [0, 0, 1, 1], [], []>} : vector<256x128xbf16>, vector<128x128xbf16>, vector<256x128xf32> -> vector<256x128xf32>
    %c0_3 = arith.constant 0 : index
    %c0_4 = arith.constant 0 : index
    %3 = vector.load %arg3[%c0_3, %c0_4] : memref<1x128xf32, #tpu.memory_space<vmem>>, vector<1x128xf32>
    %4 = vector.broadcast %3 : vector<1x128xf32> to vector<256x128xf32>
    %5 = arith.addf %2, %4 : vector<256x128xf32>
    %cst_5 = arith.constant dense<0.000000e+00> : vector<256xf32>
    %6 = vector.multi_reduction <add>, %5, %cst_5 [1] : vector<256x128xf32> to vector<256xf32>
    %7 = vector.shape_cast %6 : vector<256xf32> to vector<256x1xf32>
    %cst_6 = arith.constant 3.125000e-02 : f32
    %8 = vector.broadcast %cst_6 : f32 to vector<256x1xf32>
    %9 = arith.mulf %7, %8 : vector<256x1xf32>
    %10 = arith.mulf %5, %5 : vector<256x128xf32>
    %cst_7 = arith.constant dense<0.000000e+00> : vector<256xf32>
    %11 = vector.multi_reduction <add>, %10, %cst_7 [1] : vector<256x128xf32> to vector<256xf32>
    %12 = vector.shape_cast %11 : vector<256xf32> to vector<256x1xf32>
    %cst_8 = arith.constant 3.125000e-02 : f32
    %13 = vector.broadcast %cst_8 : f32 to vector<256x1xf32>
    %14 = arith.mulf %12, %13 : vector<256x1xf32>
    %15 = arith.mulf %9, %9 : vector<256x1xf32>
    %16 = arith.subf %14, %15 : vector<256x1xf32>
    %cst_9 = arith.constant 0.000000e+00 : f32
    %17 = vector.broadcast %cst_9 : f32 to vector<256x1xf32>
    %18 = arith.maximumf %16, %17 : vector<256x1xf32>
    %19 = vector.broadcast %9 : vector<256x1xf32> to vector<256x128xf32>
    %20 = arith.subf %5, %19 : vector<256x128xf32>
    %cst_10 = arith.constant 9.99999974E-6 : f32
    %21 = vector.broadcast %cst_10 : f32 to vector<256x1xf32>
    %22 = arith.addf %18, %21 : vector<256x1xf32>
    %23 = math.rsqrt %22 : vector<256x1xf32>
    %24 = vector.broadcast %23 : vector<256x1xf32> to vector<256x128xf32>
    %25 = arith.mulf %20, %24 : vector<256x128xf32>
    %c0_11 = arith.constant 0 : index
    %c0_12 = arith.constant 0 : index
    %26 = vector.load %arg4[%c0_11, %c0_12] : memref<1x128xf32, #tpu.memory_space<vmem>>, vector<1x128xf32>
    %27 = vector.broadcast %26 : vector<1x128xf32> to vector<256x128xf32>
    %28 = arith.mulf %25, %27 : vector<256x128xf32>
    %c0_13 = arith.constant 0 : index
    %c0_14 = arith.constant 0 : index
    %29 = vector.load %arg5[%c0_13, %c0_14] : memref<1x128xf32, #tpu.memory_space<vmem>>, vector<1x128xf32>
    %30 = vector.broadcast %29 : vector<1x128xf32> to vector<256x128xf32>
    %31 = arith.addf %28, %30 : vector<256x128xf32>
    %32 = arith.truncf %31 : vector<256x128xf32> to vector<256x128xbf16>
    %c0_15 = arith.constant 0 : index
    %c0_16 = arith.constant 0 : index
    %33 = vector.load %arg6[%c0_15, %c0_16] : memref<128x128xbf16, #tpu.memory_space<vmem>>, vector<128x128xbf16>
    %cst_17 = arith.constant dense<0.000000e+00> : vector<256x128xf32>
    %34 = tpu.matmul %32, %33, %cst_17 {dimension_numbers = #tpu.dot_dimension_numbers<[1], [0], [0], [1], [0, 0, 1, 1], [], []>} : vector<256x128xbf16>, vector<128x128xbf16>, vector<256x128xf32> -> vector<256x128xf32>
    %c0_18 = arith.constant 0 : index
    %c0_19 = arith.constant 0 : index
    %35 = vector.load %arg7[%c0_18, %c0_19] : memref<1x128xf32, #tpu.memory_space<vmem>>, vector<1x128xf32>
    %36 = vector.broadcast %35 : vector<1x128xf32> to vector<256x128xf32>
    %37 = arith.addf %34, %36 : vector<256x128xf32>
    %cst_20 = arith.constant 5.000000e-01 : f32
    %38 = vector.broadcast %cst_20 : f32 to vector<256x128xf32>
    %39 = arith.mulf %38, %37 : vector<256x128xf32>
    %cst_21 = arith.constant 4.471500e-02 : f32
    %40 = vector.broadcast %cst_21 : f32 to vector<256x128xf32>
    %41 = arith.mulf %40, %37 : vector<256x128xf32>
    %42 = arith.mulf %41, %37 : vector<256x128xf32>
    %43 = arith.mulf %42, %37 : vector<256x128xf32>
    %44 = arith.addf %37, %43 : vector<256x128xf32>
    %cst_22 = arith.constant 0.797884583 : f32
    %45 = vector.broadcast %cst_22 : f32 to vector<256x128xf32>
    %46 = arith.mulf %45, %44 : vector<256x128xf32>
    %47 = math.tanh %46 : vector<256x128xf32>
    %cst_23 = arith.constant 1.000000e+00 : f32
    %48 = vector.broadcast %cst_23 : f32 to vector<256x128xf32>
    %49 = arith.addf %48, %47 : vector<256x128xf32>
    %50 = arith.mulf %39, %49 : vector<256x128xf32>
    %51 = arith.truncf %50 : vector<256x128xf32> to vector<256x128xbf16>
    %c0_24 = arith.constant 0 : index
    %c0_25 = arith.constant 0 : index
    %52 = vector.load %arg8[%c0_24, %c0_25] : memref<128x128xbf16, #tpu.memory_space<vmem>>, vector<128x128xbf16>
    %cst_26 = arith.constant dense<0.000000e+00> : vector<256x128xf32>
    %53 = tpu.matmul %51, %52, %cst_26 {dimension_numbers = #tpu.dot_dimension_numbers<[1], [0], [0], [1], [0, 0, 1, 1], [], []>} : vector<256x128xbf16>, vector<128x128xbf16>, vector<256x128xf32> -> vector<256x128xf32>
    %c0_27 = arith.constant 0 : index
    %c0_28 = arith.constant 0 : index
    %54 = vector.load %arg9[%c0_27, %c0_28] : memref<1x128xf32, #tpu.memory_space<vmem>>, vector<1x128xf32>
    %55 = vector.broadcast %54 : vector<1x128xf32> to vector<256x128xf32>
    %56 = arith.addf %53, %55 : vector<256x128xf32>
    %c0_29 = arith.constant 0 : index
    %c0_30 = arith.constant 0 : index
    %57 = vector.load %arg14[%c0_29, %c0_30] : memref<256x128xf32, #tpu.memory_space<vmem>>, vector<256x128xf32>
    tpu.vector_store %arg14[%c0_29, %c0_30], %56 {strides = array<i32>} : memref<256x128xf32, #tpu.memory_space<vmem>>, vector<256x128xf32>,
    %58 = arith.truncf %56 : vector<256x128xf32> to vector<256x128xbf16>
    %c0_31 = arith.constant 0 : index
    %c0_32 = arith.constant 0 : index
    %59 = vector.load %arg10[%c0_31, %c0_32] : memref<128x128xbf16, #tpu.memory_space<vmem>>, vector<128x128xbf16>
    %cst_33 = arith.constant dense<0.000000e+00> : vector<256x128xf32>
    %60 = tpu.matmul %58, %59, %cst_33 {dimension_numbers = #tpu.dot_dimension_numbers<[1], [0], [0], [1], [0, 0, 1, 1], [], []>} : vector<256x128xbf16>, vector<128x128xbf16>, vector<256x128xf32> -> vector<256x128xf32>
    %c0_34 = arith.constant 0 : index
    %c0_35 = arith.constant 0 : index
    %61 = vector.load %arg11[%c0_34, %c0_35] : memref<1x128xf32, #tpu.memory_space<vmem>>, vector<1x128xf32>
    %62 = vector.broadcast %61 : vector<1x128xf32> to vector<256x128xf32>
    %63 = arith.addf %60, %62 : vector<256x128xf32>
    %cst_36 = arith.constant dense<0.000000e+00> : vector<256xf32>
    %64 = vector.multi_reduction <add>, %63, %cst_36 [1] : vector<256x128xf32> to vector<256xf32>
    %65 = vector.shape_cast %64 : vector<256xf32> to vector<256x1xf32>
    %cst_37 = arith.constant 1.562500e-02 : f32
    %66 = vector.broadcast %cst_37 : f32 to vector<256x1xf32>
    %67 = arith.mulf %65, %66 : vector<256x1xf32>
    %68 = arith.mulf %63, %63 : vector<256x128xf32>
    %cst_38 = arith.constant dense<0.000000e+00> : vector<256xf32>
    %69 = vector.multi_reduction <add>, %68, %cst_38 [1] : vector<256x128xf32> to vector<256xf32>
    %70 = vector.shape_cast %69 : vector<256xf32> to vector<256x1xf32>
    %cst_39 = arith.constant 1.562500e-02 : f32
    %71 = vector.broadcast %cst_39 : f32 to vector<256x1xf32>
    %72 = arith.mulf %70, %71 : vector<256x1xf32>
    %73 = arith.mulf %67, %67 : vector<256x1xf32>
    %74 = arith.subf %72, %73 : vector<256x1xf32>
    %cst_40 = arith.constant 0.000000e+00 : f32
    %75 = vector.broadcast %cst_40 : f32 to vector<256x1xf32>
    %76 = arith.maximumf %74, %75 : vector<256x1xf32>
    %77 = vector.broadcast %67 : vector<256x1xf32> to vector<256x128xf32>
    %78 = arith.subf %63, %77 : vector<256x128xf32>
    %cst_41 = arith.constant 9.99999974E-6 : f32
    %79 = vector.broadcast %cst_41 : f32 to vector<256x1xf32>
    %80 = arith.addf %76, %79 : vector<256x1xf32>
    %81 = math.rsqrt %80 : vector<256x1xf32>
    %82 = vector.broadcast %81 : vector<256x1xf32> to vector<256x128xf32>
    %83 = arith.mulf %78, %82 : vector<256x128xf32>
    %c0_42 = arith.constant 0 : index
    %c0_43 = arith.constant 0 : index
    %84 = vector.load %arg12[%c0_42, %c0_43] : memref<1x128xf32, #tpu.memory_space<vmem>>, vector<1x128xf32>
    %85 = vector.broadcast %84 : vector<1x128xf32> to vector<256x128xf32>
    %86 = arith.mulf %83, %85 : vector<256x128xf32>
    %c0_44 = arith.constant 0 : index
    %c0_45 = arith.constant 0 : index
    %87 = vector.load %arg13[%c0_44, %c0_45] : memref<1x128xf32, #tpu.memory_space<vmem>>, vector<1x128xf32>
    %88 = vector.broadcast %87 : vector<1x128xf32> to vector<256x128xf32>
    %89 = arith.addf %86, %88 : vector<256x128xf32>
    %c0_46 = arith.constant 0 : index
    %c0_47 = arith.constant 0 : index
    %90 = vector.load %arg15[%c0_46, %c0_47] : memref<256x128xf32, #tpu.memory_space<vmem>>, vector<256x128xf32>
    tpu.vector_store %arg15[%c0_46, %c0_47], %89 {strides = array<i32>} : memref<256x128xf32, #tpu.memory_space<vmem>>, vector<256x128xf32>,
    return
  }
  func.func @transform_0(%arg0: i32) -> (i32, i32) {
    %c0_i32 = arith.constant 0 : i32
    %c0_i32_0 = arith.constant 0 : i32
    return %arg0, %c0_i32 : i32, i32
  }
  func.func @transform_1(%arg0: i32) -> (i32, i32) {
    %c0_i32 = arith.constant 0 : i32
    %c0_i32_0 = arith.constant 0 : i32
    %c0_i32_1 = arith.constant 0 : i32
    return %c0_i32, %c0_i32_0 : i32, i32
  }
  func.func @transform_2(%arg0: i32) -> (i32, i32) {
    %c0_i32 = arith.constant 0 : i32
    %c0_i32_0 = arith.constant 0 : i32
    %c0_i32_1 = arith.constant 0 : i32
    return %c0_i32, %c0_i32_0 : i32, i32
  }
  func.func @transform_3(%arg0: i32) -> (i32, i32) {
    %c0_i32 = arith.constant 0 : i32
    %c0_i32_0 = arith.constant 0 : i32
    %c0_i32_1 = arith.constant 0 : i32
    return %c0_i32, %c0_i32_0 : i32, i32
  }
  func.func @transform_4(%arg0: i32) -> (i32, i32) {
    %c0_i32 = arith.constant 0 : i32
    %c0_i32_0 = arith.constant 0 : i32
    %c0_i32_1 = arith.constant 0 : i32
    return %c0_i32, %c0_i32_0 : i32, i32
  }
  func.func @transform_5(%arg0: i32) -> (i32, i32) {
    %c0_i32 = arith.constant 0 : i32
    %c0_i32_0 = arith.constant 0 : i32
    %c0_i32_1 = arith.constant 0 : i32
    return %c0_i32, %c0_i32_0 : i32, i32
  }
  func.func @transform_6(%arg0: i32) -> (i32, i32) {
    %c0_i32 = arith.constant 0 : i32
    %c0_i32_0 = arith.constant 0 : i32
    %c0_i32_1 = arith.constant 0 : i32
    return %c0_i32, %c0_i32_0 : i32, i32
  }
  func.func @transform_7(%arg0: i32) -> (i32, i32) {
    %c0_i32 = arith.constant 0 : i32
    %c0_i32_0 = arith.constant 0 : i32
    %c0_i32_1 = arith.constant 0 : i32
    return %c0_i32, %c0_i32_0 : i32, i32
  }
  func.func @transform_8(%arg0: i32) -> (i32, i32) {
    %c0_i32 = arith.constant 0 : i32
    %c0_i32_0 = arith.constant 0 : i32
    %c0_i32_1 = arith.constant 0 : i32
    return %c0_i32, %c0_i32_0 : i32, i32
  }
  func.func @transform_9(%arg0: i32) -> (i32, i32) {
    %c0_i32 = arith.constant 0 : i32
    %c0_i32_0 = arith.constant 0 : i32
    %c0_i32_1 = arith.constant 0 : i32
    return %c0_i32, %c0_i32_0 : i32, i32
  }
  func.func @transform_10(%arg0: i32) -> (i32, i32) {
    %c0_i32 = arith.constant 0 : i32
    %c0_i32_0 = arith.constant 0 : i32
    %c0_i32_1 = arith.constant 0 : i32
    return %c0_i32, %c0_i32_0 : i32, i32
  }
  func.func @transform_11(%arg0: i32) -> (i32, i32) {
    %c0_i32 = arith.constant 0 : i32
    %c0_i32_0 = arith.constant 0 : i32
    %c0_i32_1 = arith.constant 0 : i32
    return %c0_i32, %c0_i32_0 : i32, i32
  }
  func.func @transform_12(%arg0: i32) -> (i32, i32) {
    %c0_i32 = arith.constant 0 : i32
    %c0_i32_0 = arith.constant 0 : i32
    %c0_i32_1 = arith.constant 0 : i32
    return %c0_i32, %c0_i32_0 : i32, i32
  }
  func.func @transform_13(%arg0: i32) -> (i32, i32) {
    %c0_i32 = arith.constant 0 : i32
    %c0_i32_0 = arith.constant 0 : i32
    return %arg0, %c0_i32 : i32, i32
  }
  func.func @transform_14(%arg0: i32) -> (i32, i32) {
    %c0_i32 = arith.constant 0 : i32
    %c0_i32_0 = arith.constant 0 : i32
    return %arg0, %c0_i32 : i32, i32
  }
}

</mosaic_0001>

<llo_original>
// kernel: patch_embed_conv_pallas.1
$region0: #{patch_embed_conv_pallas.1}
  #allocation0 [shape = 'u32[]', space=smem, size = 0x4, offset = 0x4, fixed_abs, tag = 'smem constant byte address 0x4 - core index']
  #allocation1 [shape = 'u32[144,128]{1,0:T(1,128)}', space=vmem, size = 0x12000, scoped, tag = 'internal scratch']
  %s0 = inlined_call_operand.vmem [shape: bf16[256,128], index: 0, kind: input, shape index: {}]
  %s1 = inlined_call_operand.vmem [shape: bf16[128,128], index: 1, kind: input, shape index: {}]
  %s2 = inlined_call_operand.vmem [shape: f32[1,128], index: 2, kind: input, shape index: {}]
  %s3 = inlined_call_operand.vmem [shape: f32[1,128], index: 3, kind: input, shape index: {}]
  %s4 = inlined_call_operand.vmem [shape: f32[1,128], index: 4, kind: input, shape index: {}]
  %s5 = inlined_call_operand.vmem [shape: bf16[128,128], index: 5, kind: input, shape index: {}]
  %s6 = inlined_call_operand.vmem [shape: f32[1,128], index: 6, kind: input, shape index: {}]
  %s7 = inlined_call_operand.vmem [shape: bf16[128,128], index: 7, kind: input, shape index: {}]
  %s8 = inlined_call_operand.vmem [shape: f32[1,128], index: 8, kind: input, shape index: {}]
  %s9 = inlined_call_operand.vmem [shape: bf16[128,128], index: 9, kind: input, shape index: {}]
  %s10 = inlined_call_operand.vmem [shape: f32[1,128], index: 10, kind: input, shape index: {}]
  %s11 = inlined_call_operand.vmem [shape: f32[1,128], index: 11, kind: input, shape index: {}]
  %s12 = inlined_call_operand.vmem [shape: f32[1,128], index: 12, kind: input, shape index: {}]
  %s13 = inlined_call_operand.vmem [shape: f32[256,128], index: 13, kind: output, shape index: {0}]
  %s14 = inlined_call_operand.vmem [shape: f32[256,128], index: 14, kind: output, shape index: {1}]
  %15 = xla_tuple %s13, %s14
  %s16 = sld [smem:[#allocation0]]
  $region70: #{patch_embed_conv_pallas.1} parent=0
    _
  %s18 = ssub.s32 1, %s16
  %s19 = scalar_select 0, %s18, %s16
  // Predicated region
  $region2: #{patch_embed_conv_pallas.1} parent=0 // pred_check
    _
  $region3: #{patch_embed_conv_pallas.1} parent=0 // pred_check_branch
    %21 = sbr.rel (0) target = $region5
  $region4: #{patch_embed_conv_pallas.1} parent=0 // pred_region
    _
  $region5: #{patch_embed_conv_pallas.1} parent=0 // pred_fallthru
    _
  // Predicated region
  $region6: #{patch_embed_conv_pallas.1} parent=0 // pred_check
    _
  $region7: #{patch_embed_conv_pallas.1} parent=0 // pred_check_branch
    %23 = sbr.rel (0) target = $region9
  $region8: #{patch_embed_conv_pallas.1} parent=0 // pred_region
    _
  $region9: #{patch_embed_conv_pallas.1} parent=0 // pred_fallthru
    _
  // Predicated region
  $region10: #{patch_embed_conv_pallas.1} parent=0 // pred_check
    _
  $region11: #{patch_embed_conv_pallas.1} parent=0 // pred_check_branch
    %25 = sbr.rel (0) target = $region13
  $region12: #{patch_embed_conv_pallas.1} parent=0 // pred_region
    _
  $region13: #{patch_embed_conv_pallas.1} parent=0 // pred_fallthru
    _
  // Predicated region
  $region14: #{patch_embed_conv_pallas.1} parent=0 // pred_check
    _
  $region15: #{patch_embed_conv_pallas.1} parent=0 // pred_check_branch
    %27 = sbr.rel (0) target = $region17
  $region16: #{patch_embed_conv_pallas.1} parent=0 // pred_region
    _
  $region17: #{patch_embed_conv_pallas.1} parent=0 // pred_fallthru
    _
  // Predicated region
  $region18: #{patch_embed_conv_pallas.1} parent=0 // pred_check
    _
  $region19: #{patch_embed_conv_pallas.1} parent=0 // pred_check_branch
    %29 = sbr.rel (0) target = $region21
  $region20: #{patch_embed_conv_pallas.1} parent=0 // pred_region
    _
  $region21: #{patch_embed_conv_pallas.1} parent=0 // pred_fallthru
    _
  // Predicated region
  $region22: #{patch_embed_conv_pallas.1} parent=0 // pred_check
    _
  $region23: #{patch_embed_conv_pallas.1} parent=0 // pred_check_branch
    %31 = sbr.rel (0) target = $region25
  $region24: #{patch_embed_conv_pallas.1} parent=0 // pred_region
    _
  $region25: #{patch_embed_conv_pallas.1} parent=0 // pred_fallthru
    _
  // Predicated region
  $region26: #{patch_embed_conv_pallas.1} parent=0 // pred_check
    _
  $region27: #{patch_embed_conv_pallas.1} parent=0 // pred_check_branch
    %33 = sbr.rel (0) target = $region29
  $region28: #{patch_embed_conv_pallas.1} parent=0 // pred_region
    _
  $region29: #{patch_embed_conv_pallas.1} parent=0 // pred_fallthru
    _
  // Predicated region
  $region30: #{patch_embed_conv_pallas.1} parent=0 // pred_check
    _
  $region31: #{patch_embed_conv_pallas.1} parent=0 // pred_check_branch
    %35 = sbr.rel (0) target = $region33
  $region32: #{patch_embed_conv_pallas.1} parent=0 // pred_region
    _
  $region33: #{patch_embed_conv_pallas.1} parent=0 // pred_fallthru
    _
  // Predicated region
  $region34: #{patch_embed_conv_pallas.1} parent=0 // pred_check
    _
  $region35: #{patch_embed_conv_pallas.1} parent=0 // pred_check_branch
    %37 = sbr.rel (0) target = $region37
  $region36: #{patch_embed_conv_pallas.1} parent=0 // pred_region
    _
  $region37: #{patch_embed_conv_pallas.1} parent=0 // pred_fallthru
    _
  // Predicated region
  $region38: #{patch_embed_conv_pallas.1} parent=0 // pred_check
    _
  $region39: #{patch_embed_conv_pallas.1} parent=0 // pred_check_branch
    %39 = sbr.rel (0) target = $region41
  $region40: #{patch_embed_conv_pallas.1} parent=0 // pred_region
    _
  $region41: #{patch_embed_conv_pallas.1} parent=0 // pred_fallthru
    _
  // Predicated region
  $region42: #{patch_embed_conv_pallas.1} parent=0 // pred_check
    _
  $region43: #{patch_embed_conv_pallas.1} parent=0 // pred_check_branch
    %41 = sbr.rel (0) target = $region45
  $region44: #{patch_embed_conv_pallas.1} parent=0 // pred_region
    _
  $region45: #{patch_embed_conv_pallas.1} parent=0 // pred_fallthru
    _
  // Predicated region
  $region46: #{patch_embed_conv_pallas.1} parent=0 // pred_check
    _
  $region47: #{patch_embed_conv_pallas.1} parent=0 // pred_check_branch
    %43 = sbr.rel (0) target = $region49
  $region48: #{patch_embed_conv_pallas.1} parent=0 // pred_region
    _
  $region49: #{patch_embed_conv_pallas.1} parent=0 // pred_fallthru
    _
  // Predicated region
  $region50: #{patch_embed_conv_pallas.1} parent=0 // pred_check
    _
  $region51: #{patch_embed_conv_pallas.1} parent=0 // pred_check_branch
    %45 = sbr.rel (0) target = $region53
  $region52: #{patch_embed_conv_pallas.1} parent=0 // pred_region
    _
  $region53: #{patch_embed_conv_pallas.1} parent=0 // pred_fallthru
    _
  %v47 = vld [vmem:[%s0] sm:$0xf]
  %v48 = vld [vmem:[%s0 + $0x4] sm:$0xf]
  %v49 = vld [vmem:[%s0 + $0x8] sm:$0xf]
  %v50 = vld [vmem:[%s0 + $0xc] sm:$0xf]
  %v51 = vld [vmem:[%s0 + $0x10] sm:$0xf]
  %v52 = vld [vmem:[%s0 + $0x14] sm:$0xf]
  %v53 = vld [vmem:[%s0 + $0x18] sm:$0xf]
  %v54 = vld [vmem:[%s0 + $0x1c] sm:$0xf]
  %v55 = vld [vmem:[%s0 + $0x20] sm:$0xf]
  %v56 = vld [vmem:[%s0 + $0x24] sm:$0xf]
  %v57 = vld [vmem:[%s0 + $0x28] sm:$0xf]
  %v58 = vld [vmem:[%s0 + $0x2c] sm:$0xf]
  %v59 = vld [vmem:[%s0 + $0x30] sm:$0xf]
  %v60 = vld [vmem:[%s0 + $0x34] sm:$0xf]
  %v61 = vld [vmem:[%s0 + $0x38] sm:$0xf]
  %v62 = vld [vmem:[%s0 + $0x3c] sm:$0xf]
  %v63 = vld [vmem:[%s0 + $0x40] sm:$0xf]
  %v64 = vld [vmem:[%s0 + $0x44] sm:$0xf]
  %v65 = vld [vmem:[%s0 + $0x48] sm:$0xf]
  %v66 = vld [vmem:[%s0 + $0x4c] sm:$0xf]
  %v67 = vld [vmem:[%s0 + $0x50] sm:$0xf]
  %v68 = vld [vmem:[%s0 + $0x54] sm:$0xf]
  %v69 = vld [vmem:[%s0 + $0x58] sm:$0xf]
  %v70 = vld [vmem:[%s0 + $0x5c] sm:$0xf]
  %v71 = vld [vmem:[%s0 + $0x60] sm:$0xf]
  %v72 = vld [vmem:[%s0 + $0x64] sm:$0xf]
  %v73 = vld [vmem:[%s0 + $0x68] sm:$0xf]
  %v74 = vld [vmem:[%s0 + $0x6c] sm:$0xf]
  %v75 = vld [vmem:[%s0 + $0x70] sm:$0xf]
  %v76 = vld [vmem:[%s0 + $0x74] sm:$0xf]
  %v77 = vld [vmem:[%s0 + $0x78] sm:$0xf]
  %v78 = vld [vmem:[%s0 + $0x7c] sm:$0xf]
  %v79 = vld [vmem:[%s1] sm:$0xf]
  %v80 = vld [vmem:[%s1 + $0x4] sm:$0xf]
  %v81 = vld [vmem:[%s1 + $0x8] sm:$0xf]
  %v82 = vld [vmem:[%s1 + $0xc] sm:$0xf]
  %v83 = vld [vmem:[%s1 + $0x10] sm:$0xf]
  %v84 = vld [vmem:[%s1 + $0x14] sm:$0xf]
  %v85 = vld [vmem:[%s1 + $0x18] sm:$0xf]
  %v86 = vld [vmem:[%s1 + $0x1c] sm:$0xf]
  %v87 = vld [vmem:[%s1 + $0x20] sm:$0xf]
  %v88 = vld [vmem:[%s1 + $0x24] sm:$0xf]
  %v89 = vld [vmem:[%s1 + $0x28] sm:$0xf]
  %v90 = vld [vmem:[%s1 + $0x2c] sm:$0xf]
  %v91 = vld [vmem:[%s1 + $0x30] sm:$0xf]
  %v92 = vld [vmem:[%s1 + $0x34] sm:$0xf]
  %v93 = vld [vmem:[%s1 + $0x38] sm:$0xf]
  %v94 = vld [vmem:[%s1 + $0x3c] sm:$0xf]
  %v95 = vld [vmem:[%s2] sm:$0x1]
  %v97 = vlaneseq
  %v98 = vshrl.u32 %v97, 7
  %v99 = vsub.s32 0, %v98
  %v100 = vrot.slane %v95, %v99
  %v134 = vunpack.c.l.b16 %v47
  %v135 = vunpack.c.l.b16 %v48
  %v136 = vunpack.c.l.b16 %v49
  %v137 = vunpack.c.l.b16 %v50
  %v138 = vunpack.c.l.b16 %v51
  %v139 = vunpack.c.l.b16 %v52
  %v140 = vunpack.c.l.b16 %v53
  %v141 = vunpack.c.l.b16 %v54
  %v142 = vunpack.c.l.b16 %v55
  %v143 = vunpack.c.l.b16 %v56
  %v144 = vunpack.c.l.b16 %v57
  %v145 = vunpack.c.l.b16 %v58
  %v146 = vunpack.c.l.b16 %v59
  %v147 = vunpack.c.l.b16 %v60
  %v148 = vunpack.c.l.b16 %v61
  %v149 = vunpack.c.l.b16 %v62
  %v150 = vunpack.c.l.b16 %v63
  %v151 = vunpack.c.l.b16 %v64
  %v152 = vunpack.c.l.b16 %v65
  %v153 = vunpack.c.l.b16 %v66
  %v154 = vunpack.c.l.b16 %v67
  %v155 = vunpack.c.l.b16 %v68
  %v156 = vunpack.c.l.b16 %v69
  %v157 = vunpack.c.l.b16 %v70
  %v158 = vunpack.c.l.b16 %v71
  %v159 = vunpack.c.l.b16 %v72
  %v160 = vunpack.c.l.b16 %v73
  %v161 = vunpack.c.l.b16 %v74
  %v162 = vunpack.c.l.b16 %v75
  %v163 = vunpack.c.l.b16 %v76
  %v164 = vunpack.c.l.b16 %v77
  %v165 = vunpack.c.l.b16 %v78
  %v166 = vpack.c.b16 %v135, %v134
  %v167 = vpack.c.b16 %v137, %v136
  %v168 = vpack.c.b16 %v139, %v138
  %v169 = vpack.c.b16 %v141, %v140
  %v170 = vpack.c.b16 %v143, %v142
  %v171 = vpack.c.b16 %v145, %v144
  %v172 = vpack.c.b16 %v147, %v146
  %v173 = vpack.c.b16 %v149, %v148
  %v174 = vpack.c.b16 %v151, %v150
  %v175 = vpack.c.b16 %v153, %v152
  %v176 = vpack.c.b16 %v155, %v154
  %v177 = vpack.c.b16 %v157, %v156
  %v178 = vpack.c.b16 %v159, %v158
  %v179 = vpack.c.b16 %v161, %v160
  %v180 = vpack.c.b16 %v163, %v162
  %v181 = vpack.c.b16 %v165, %v164
  %v214 = vunpack.c.l.b16 %v79
  %v215 = vunpack.c.l.b16 %v80
  %v216 = vunpack.c.l.b16 %v81
  %v217 = vunpack.c.l.b16 %v82
  %v218 = vunpack.c.l.b16 %v83
  %v219 = vunpack.c.l.b16 %v84
  %v220 = vunpack.c.l.b16 %v85
  %v221 = vunpack.c.l.b16 %v86
  %v222 = vunpack.c.l.b16 %v87
  %v223 = vunpack.c.l.b16 %v88
  %v224 = vunpack.c.l.b16 %v89
  %v225 = vunpack.c.l.b16 %v90
  %v226 = vunpack.c.l.b16 %v91
  %v227 = vunpack.c.l.b16 %v92
  %v228 = vunpack.c.l.b16 %v93
  %v229 = vunpack.c.l.b16 %v94
  %v230 = vpack.c.b16 %v215, %v214
  %v231 = vpack.c.b16 %v217, %v216
  %v232 = vpack.c.b16 %v219, %v218
  %v233 = vpack.c.b16 %v221, %v220
  %v234 = vpack.c.b16 %v223, %v222
  %v235 = vpack.c.b16 %v225, %v224
  %v236 = vpack.c.b16 %v227, %v226
  %v237 = vpack.c.b16 %v229, %v228
  %246 = vmatprep.subr.bf16.mxu0 0
  %247 = vmatpush1.bf16.msra.mxu0 %v230
  %248 = vmatprep.subr.bf16.mxu0 0
  %249 = vmatpush1.bf16.msra.mxu0 %v231
  %250 = vmatprep.subr.bf16.mxu0 0
  %251 = vmatpush1.bf16.msra.mxu0 %v232
  %252 = vmatprep.subr.bf16.mxu0 0
  %253 = vmatpush1.bf16.msra.mxu0 %v233
  %254 = vmatprep.subr.bf16.mxu0 0
  %255 = vmatpush1.bf16.msra.mxu0 %v234
  %256 = vmatprep.subr.bf16.mxu0 0
  %257 = vmatpush1.bf16.msra.mxu0 %v235
  %258 = vmatprep.subr.bf16.mxu0 0
  %259 = vmatpush1.bf16.msra.mxu0 %v236
  %260 = vmatprep.subr.bf16.mxu0 0
  %261 = vmatpush1.bf16.msra.mxu0 %v237
  %262 = vmatprep.subr.bf16.mxu0 0
  %263 = vmatpush1.bf16.msra.mxu0 0
  %264 = vmatprep.subr.bf16.mxu0 0
  %265 = vmatpush1.bf16.msra.mxu0 0
  %266 = vmatprep.subr.bf16.mxu0 0
  %267 = vmatpush1.bf16.msra.mxu0 0
  %268 = vmatprep.subr.bf16.mxu0 0
  %269 = vmatpush1.bf16.msra.mxu0 0
  %270 = vmatprep.subr.bf16.mxu0 0
  %271 = vmatpush1.bf16.msra.mxu0 0
  %272 = vmatprep.subr.bf16.mxu0 0
  %273 = vmatpush1.bf16.msra.mxu0 0
  %274 = vmatprep.subr.bf16.mxu0 0
  %275 = vmatpush1.bf16.msra.mxu0 0
  %276 = vmatprep.subr.bf16.mxu0 0
  %277 = vmatpush1.bf16.msra.mxu0 0
  %278 = vmatprep.mubr.bf16.mxu0 0
  %279 = vmatmul.mubr.bf16.gmra.mrb[0].mxu0 %v166
  %v280 = vpop.f32.mrb[0].mxu0
  %v281 = vadd.f32 %v100, %v280
  %v282 = vpop.f32.mrb[0].mxu0
  %v283 = vpop.f32.mrb[0].mxu0
  %v284 = vadd.f32 %v100, %v283
  %v285 = vpop.f32.mrb[0].mxu0
  %286 = vmatprep.mubr.bf16.mxu0 0
  %287 = vmatmul.mubr.bf16.gmra.mrb[0].mxu0 %v167
  %v288 = vpop.f32.mrb[0].mxu0
  %v289 = vadd.f32 %v100, %v288
  %v290 = vpop.f32.mrb[0].mxu0
  %v291 = vpop.f32.mrb[0].mxu0
  %v292 = vadd.f32 %v100, %v291
  %v293 = vpop.f32.mrb[0].mxu0
  %294 = vmatprep.mubr.bf16.mxu0 0
  %295 = vmatmul.mubr.bf16.gmra.mrb[0].mxu0 %v168
  %v296 = vpop.f32.mrb[0].mxu0
  %v297 = vadd.f32 %v100, %v296
  %v298 = vpop.f32.mrb[0].mxu0
  %v299 = vpop.f32.mrb[0].mxu0
  %v300 = vadd.f32 %v100, %v299
  %v301 = vpop.f32.mrb[0].mxu0
  %302 = vmatprep.mubr.bf16.mxu0 0
  %303 = vmatmul.mubr.bf16.gmra.mrb[0].mxu0 %v169
  %v304 = vpop.f32.mrb[0].mxu0
  %v305 = vadd.f32 %v100, %v304
  %v306 = vpop.f32.mrb[0].mxu0
  %v307 = vpop.f32.mrb[0].mxu0
  %v308 = vadd.f32 %v100, %v307
  %v309 = vpop.f32.mrb[0].mxu0
  %310 = vmatprep.mubr.bf16.mxu0 0
  %311 = vmatmul.mubr.bf16.gmra.mrb[0].mxu0 %v170
  %v312 = vpop.f32.mrb[0].mxu0
  %v313 = vadd.f32 %v100, %v312
  %v314 = vpop.f32.mrb[0].mxu0
  %v315 = vpop.f32.mrb[0].mxu0
  %v316 = vadd.f32 %v100, %v315
  %v317 = vpop.f32.mrb[0].mxu0
  %318 = vmatprep.mubr.bf16.mxu0 0
  %319 = vmatmul.mubr.bf16.gmra.mrb[0].mxu0 %v171
  %v320 = vpop.f32.mrb[0].mxu0
  %v321 = vadd.f32 %v100, %v320
  %v322 = vpop.f32.mrb[0].mxu0
  %v323 = vpop.f32.mrb[0].mxu0
  %v324 = vadd.f32 %v100, %v323
  %v325 = vpop.f32.mrb[0].mxu0
  %326 = vmatprep.mubr.bf16.mxu0 0
  %327 = vmatmul.mubr.bf16.gmra.mrb[0].mxu0 %v172
  %v328 = vpop.f32.mrb[0].mxu0
  %v329 = vadd.f32 %v100, %v328
  %v330 = vpop.f32.mrb[0].mxu0
  %v331 = vpop.f32.mrb[0].mxu0
  %v332 = vadd.f32 %v100, %v331
  %v333 = vpop.f32.mrb[0].mxu0
  %334 = vmatprep.mubr.bf16.mxu0 0
  %335 = vmatmul.mubr.bf16.gmra.mrb[0].mxu0 %v173
  %v336 = vpop.f32.mrb[0].mxu0
  %v337 = vadd.f32 %v100, %v336
  %v338 = vpop.f32.mrb[0].mxu0
  %v339 = vpop.f32.mrb[0].mxu0
  %v340 = vadd.f32 %v100, %v339
  %v341 = vpop.f32.mrb[0].mxu0
  %342 = vmatprep.mubr.bf16.mxu0 0
  %343 = vmatmul.mubr.bf16.gmra.mrb[0].mxu0 %v174
  %v344 = vpop.f32.mrb[0].mxu0
  %v345 = vadd.f32 %v100, %v344
  %v346 = vpop.f32.mrb[0].mxu0
  %v347 = vpop.f32.mrb[0].mxu0
  %v348 = vadd.f32 %v100, %v347
  %v349 = vpop.f32.mrb[0].mxu0
  %350 = vmatprep.mubr.bf16.mxu0 0
  %351 = vmatmul.mubr.bf16.gmra.mrb[0].mxu0 %v175
  %v352 = vpop.f32.mrb[0].mxu0
  %v353 = vadd.f32 %v100, %v352
  %v354 = vpop.f32.mrb[0].mxu0
  %v355 = vpop.f32.mrb[0].mxu0
  %v356 = vadd.f32 %v100, %v355
  %v357 = vpop.f32.mrb[0].mxu0
  %358 = vmatprep.mubr.bf16.mxu0 0
  %359 = vmatmul.mubr.bf16.gmra.mrb[0].mxu0 %v176
  %v360 = vpop.f32.mrb[0].mxu0
  %v361 = vadd.f32 %v100, %v360
  %v362 = vpop.f32.mrb[0].mxu0
  %v363 = vpop.f32.mrb[0].mxu0
  %v364 = vadd.f32 %v100, %v363
  %v365 = vpop.f32.mrb[0].mxu0
  %366 = vmatprep.mubr.bf16.mxu0 0
  %367 = vmatmul.mubr.bf16.gmra.mrb[0].mxu0 %v177
  %v368 = vpop.f32.mrb[0].mxu0
  %v369 = vadd.f32 %v100, %v368
  %v370 = vpop.f32.mrb[0].mxu0
  %v371 = vpop.f32.mrb[0].mxu0
  %v372 = vadd.f32 %v100, %v371
  %v373 = vpop.f32.mrb[0].mxu0
  %374 = vmatprep.mubr.bf16.mxu0 0
  %375 = vmatmul.mubr.bf16.gmra.mrb[0].mxu0 %v178
  %v376 = vpop.f32.mrb[0].mxu0
  %v377 = vadd.f32 %v100, %v376
  %v378 = vpop.f32.mrb[0].mxu0
  %v379 = vpop.f32.mrb[0].mxu0
  %v380 = vadd.f32 %v100, %v379
  %v381 = vpop.f32.mrb[0].mxu0
  %382 = vmatprep.mubr.bf16.mxu0 0
  %383 = vmatmul.mubr.bf16.gmra.mrb[0].mxu0 %v179
  %v384 = vpop.f32.mrb[0].mxu0
  %v385 = vadd.f32 %v100, %v384
  %v386 = vpop.f32.mrb[0].mxu0
  %v387 = vpop.f32.mrb[0].mxu0
  %v388 = vadd.f32 %v100, %v387
  %v389 = vpop.f32.mrb[0].mxu0
  %390 = vmatprep.mubr.bf16.mxu0 0
  %391 = vmatmul.mubr.bf16.gmra.mrb[0].mxu0 %v180
  %v392 = vpop.f32.mrb[0].mxu0
  %v393 = vadd.f32 %v100, %v392
  %v394 = vpop.f32.mrb[0].mxu0
  %v395 = vpop.f32.mrb[0].mxu0
  %v396 = vadd.f32 %v100, %v395
  %v397 = vpop.f32.mrb[0].mxu0
  %398 = vmatprep.mubr.bf16.mxu0 0
  %399 = vmatmul.mubr.bf16.gmra.mrb[0].mxu0 %v181
  %v400 = vpop.f32.mrb[0].mxu0
  %v401 = vadd.f32 %v100, %v400
  %v402 = vpop.f32.mrb[0].mxu0
  %v403 = vpop.f32.mrb[0].mxu0
  %v404 = vadd.f32 %v100, %v403
  %v405 = vpop.f32.mrb[0].mxu0
  %406 = vdwg.mxu0
  %407 = vadd.xlane.f32.xlu0 %v281
  %v408 = vpop.xlane.xlu0 %407
  %409 = vadd.xlane.f32.xlu0 %v284
  %v410 = vpop.xlane.xlu0 %409
  %411 = vadd.xlane.f32.xlu0 %v289
  %v412 = vpop.xlane.xlu0 %411
  %413 = vadd.xlane.f32.xlu0 %v292
  %v414 = vpop.xlane.xlu0 %413
  %415 = vadd.xlane.f32.xlu0 %v297
  %v416 = vpop.xlane.xlu0 %415
  %417 = vadd.xlane.f32.xlu0 %v300
  %v418 = vpop.xlane.xlu0 %417
  %419 = vadd.xlane.f32.xlu0 %v305
  %v420 = vpop.xlane.xlu0 %419
  %421 = vadd.xlane.f32.xlu0 %v308
  %v422 = vpop.xlane.xlu0 %421
  %423 = vadd.xlane.f32.xlu0 %v313
  %v424 = vpop.xlane.xlu0 %423
  %425 = vadd.xlane.f32.xlu0 %v316
  %v426 = vpop.xlane.xlu0 %425
  %427 = vadd.xlane.f32.xlu0 %v321
  %v428 = vpop.xlane.xlu0 %427
  %429 = vadd.xlane.f32.xlu0 %v324
  %v430 = vpop.xlane.xlu0 %429
  %431 = vadd.xlane.f32.xlu0 %v329
  %v432 = vpop.xlane.xlu0 %431
  %433 = vadd.xlane.f32.xlu0 %v332
  %v434 = vpop.xlane.xlu0 %433
  %435 = vadd.xlane.f32.xlu0 %v337
  %v436 = vpop.xlane.xlu0 %435
  %437 = vadd.xlane.f32.xlu0 %v340
  %v438 = vpop.xlane.xlu0 %437
  %439 = vadd.xlane.f32.xlu0 %v345
  %v440 = vpop.xlane.xlu0 %439
  %441 = vadd.xlane.f32.xlu0 %v348
  %v442 = vpop.xlane.xlu0 %441
  %443 = vadd.xlane.f32.xlu0 %v353
  %v444 = vpop.xlane.xlu0 %443
  %445 = vadd.xlane.f32.xlu0 %v356
  %v446 = vpop.xlane.xlu0 %445
  %447 = vadd.xlane.f32.xlu0 %v361
  %v448 = vpop.xlane.xlu0 %447
  %449 = vadd.xlane.f32.xlu0 %v364
  %v450 = vpop.xlane.xlu0 %449
  %451 = vadd.xlane.f32.xlu0 %v369
  %v452 = vpop.xlane.xlu0 %451
  %453 = vadd.xlane.f32.xlu0 %v372
  %v454 = vpop.xlane.xlu0 %453
  %455 = vadd.xlane.f32.xlu0 %v377
  %v456 = vpop.xlane.xlu0 %455
  %457 = vadd.xlane.f32.xlu0 %v380
  %v458 = vpop.xlane.xlu0 %457
  %459 = vadd.xlane.f32.xlu0 %v385
  %v460 = vpop.xlane.xlu0 %459
  %461 = vadd.xlane.f32.xlu0 %v388
  %v462 = vpop.xlane.xlu0 %461
  %463 = vadd.xlane.f32.xlu0 %v393
  %v464 = vpop.xlane.xlu0 %463
  %465 = vadd.xlane.f32.xlu0 %v396
  %v466 = vpop.xlane.xlu0 %465
  %467 = vadd.xlane.f32.xlu0 %v401
  %v468 = vpop.xlane.xlu0 %467
  %469 = vadd.xlane.f32.xlu0 %v404
  %v470 = vpop.xlane.xlu0 %469
  %v471 = vmul.f32 %v408, 0.03125
  %v472 = vmul.f32 %v410, 0.03125
  %v473 = vmul.f32 %v412, 0.03125
  %v474 = vmul.f32 %v414, 0.03125
  %v475 = vmul.f32 %v416, 0.03125
  %v476 = vmul.f32 %v418, 0.03125
  %v477 = vmul.f32 %v420, 0.03125
  %v478 = vmul.f32 %v422, 0.03125
  %v479 = vmul.f32 %v424, 0.03125
  %v480 = vmul.f32 %v426, 0.03125
  %v481 = vmul.f32 %v428, 0.03125
  %v482 = vmul.f32 %v430, 0.03125
  %v483 = vmul.f32 %v432, 0.03125
  %v484 = vmul.f32 %v434, 0.03125
  %v485 = vmul.f32 %v436, 0.03125
  %v486 = vmul.f32 %v438, 0.03125
  %v487 = vmul.f32 %v440, 0.03125
  %v488 = vmul.f32 %v442, 0.03125
  %v489 = vmul.f32 %v444, 0.03125
  %v490 = vmul.f32 %v446, 0.03125
  %v491 = vmul.f32 %v448, 0.03125
  %v492 = vmul.f32 %v450, 0.03125
  %v493 = vmul.f32 %v452, 0.03125
  %v494 = vmul.f32 %v454, 0.03125
  %v495 = vmul.f32 %v456, 0.03125
  %v496 = vmul.f32 %v458, 0.03125
  %v497 = vmul.f32 %v460, 0.03125
  %v498 = vmul.f32 %v462, 0.03125
  %v499 = vmul.f32 %v464, 0.03125
  %v500 = vmul.f32 %v466, 0.03125
  %v501 = vmul.f32 %v468, 0.03125
  %v502 = vmul.f32 %v470, 0.03125
  %v503 = vmul.f32 %v281, %v281
  %v504 = vmul.f32 %v284, %v284
  %v505 = vmul.f32 %v289, %v289
  %v506 = vmul.f32 %v292, %v292
  %v507 = vmul.f32 %v297, %v297
  %v508 = vmul.f32 %v300, %v300
  %v509 = vmul.f32 %v305, %v305
  %v510 = vmul.f32 %v308, %v308
  %v511 = vmul.f32 %v313, %v313
  %v512 = vmul.f32 %v316, %v316
  %v513 = vmul.f32 %v321, %v321
  %v514 = vmul.f32 %v324, %v324
  %v515 = vmul.f32 %v329, %v329
  %v516 = vmul.f32 %v332, %v332
  %v517 = vmul.f32 %v337, %v337
  %v518 = vmul.f32 %v340, %v340
  %v519 = vmul.f32 %v345, %v345
  %v520 = vmul.f32 %v348, %v348
  %v521 = vmul.f32 %v353, %v353
  %v522 = vmul.f32 %v356, %v356
  %v523 = vmul.f32 %v361, %v361
  %v524 = vmul.f32 %v364, %v364
  %v525 = vmul.f32 %v369, %v369
  %v526 = vmul.f32 %v372, %v372
  %v527 = vmul.f32 %v377, %v377
  %v528 = vmul.f32 %v380, %v380
  %v529 = vmul.f32 %v385, %v385
  %v530 = vmul.f32 %v388, %v388
  %v531 = vmul.f32 %v393, %v393
  %v532 = vmul.f32 %v396, %v396
  %v533 = vmul.f32 %v401, %v401
  %v534 = vmul.f32 %v404, %v404
  %535 = vadd.xlane.f32.xlu0 %v503
  %v536 = vpop.xlane.xlu0 %535
  %537 = vadd.xlane.f32.xlu0 %v504
  %v538 = vpop.xlane.xlu0 %537
  %539 = vadd.xlane.f32.xlu0 %v505
  %v540 = vpop.xlane.xlu0 %539
  %541 = vadd.xlane.f32.xlu0 %v506
  %v542 = vpop.xlane.xlu0 %541
  %543 = vadd.xlane.f32.xlu0 %v507
  %v544 = vpop.xlane.xlu0 %543
  %545 = vadd.xlane.f32.xlu0 %v508
  %v546 = vpop.xlane.xlu0 %545
  %547 = vadd.xlane.f32.xlu0 %v509
  %v548 = vpop.xlane.xlu0 %547
  %549 = vadd.xlane.f32.xlu0 %v510
  %v550 = vpop.xlane.xlu0 %549
  %551 = vadd.xlane.f32.xlu0 %v511
  %v552 = vpop.xlane.xlu0 %551
  %553 = vadd.xlane.f32.xlu0 %v512
  %v554 = vpop.xlane.xlu0 %553
  %555 = vadd.xlane.f32.xlu0 %v513
  %v556 = vpop.xlane.xlu0 %555
  %557 = vadd.xlane.f32.xlu0 %v514
  %v558 = vpop.xlane.xlu0 %557
  %559 = vadd.xlane.f32.xlu0 %v515
  %v560 = vpop.xlane.xlu0 %559
  %561 = vadd.xlane.f32.xlu0 %v516
  %v562 = vpop.xlane.xlu0 %561
  %563 = vadd.xlane.f32.xlu0 %v517
  %v564 = vpop.xlane.xlu0 %563
  %565 = vadd.xlane.f32.xlu0 %v518
  %v566 = vpop.xlane.xlu0 %565
  %567 = vadd.xlane.f32.xlu0 %v519
  %v568 = vpop.xlane.xlu0 %567
  %569 = vadd.xlane.f32.xlu0 %v520
  %v570 = vpop.xlane.xlu0 %569
  %571 = vadd.xlane.f32.xlu0 %v521
  %v572 = vpop.xlane.xlu0 %571
  %573 = vadd.xlane.f32.xlu0 %v522
  %v574 = vpop.xlane.xlu0 %573
  %575 = vadd.xlane.f32.xlu0 %v523
  %v576 = vpop.xlane.xlu0 %575
  %577 = vadd.xlane.f32.xlu0 %v524
  %v578 = vpop.xlane.xlu0 %577
  %579 = vadd.xlane.f32.xlu0 %v525
  %v580 = vpop.xlane.xlu0 %579
  %581 = vadd.xlane.f32.xlu0 %v526
  %v582 = vpop.xlane.xlu0 %581
  %583 = vadd.xlane.f32.xlu0 %v527
  %v584 = vpop.xlane.xlu0 %583
  %585 = vadd.xlane.f32.xlu0 %v528
  %v586 = vpop.xlane.xlu0 %585
  %587 = vadd.xlane.f32.xlu0 %v529
  %v588 = vpop.xlane.xlu0 %587
  %589 = vadd.xlane.f32.xlu0 %v530
  %v590 = vpop.xlane.xlu0 %589
  %591 = vadd.xlane.f32.xlu0 %v531
  %v592 = vpop.xlane.xlu0 %591
  %593 = vadd.xlane.f32.xlu0 %v532
  %v594 = vpop.xlane.xlu0 %593
  %595 = vadd.xlane.f32.xlu0 %v533
  %v596 = vpop.xlane.xlu0 %595
  %597 = vadd.xlane.f32.xlu0 %v534
  %v598 = vpop.xlane.xlu0 %597
  %v599 = vmul.f32 %v536, 0.03125
  %v600 = vmul.f32 %v538, 0.03125
  %v601 = vmul.f32 %v540, 0.03125
  %v602 = vmul.f32 %v542, 0.03125
  %v603 = vmul.f32 %v544, 0.03125
  %v604 = vmul.f32 %v546, 0.03125
  %v605 = vmul.f32 %v548, 0.03125
  %v606 = vmul.f32 %v550, 0.03125
  %v607 = vmul.f32 %v552, 0.03125
  %v608 = vmul.f32 %v554, 0.03125
  %v609 = vmul.f32 %v556, 0.03125
  %v610 = vmul.f32 %v558, 0.03125
  %v611 = vmul.f32 %v560, 0.03125
  %v612 = vmul.f32 %v562, 0.03125
  %v613 = vmul.f32 %v564, 0.03125
  %v614 = vmul.f32 %v566, 0.03125
  %v615 = vmul.f32 %v568, 0.03125
  %v616 = vmul.f32 %v570, 0.03125
  %v617 = vmul.f32 %v572, 0.03125
  %v618 = vmul.f32 %v574, 0.03125
  %v619 = vmul.f32 %v576, 0.03125
  %v620 = vmul.f32 %v578, 0.03125
  %v621 = vmul.f32 %v580, 0.03125
  %v622 = vmul.f32 %v582, 0.03125
  %v623 = vmul.f32 %v584, 0.03125
  %v624 = vmul.f32 %v586, 0.03125
  %v625 = vmul.f32 %v588, 0.03125
  %v626 = vmul.f32 %v590, 0.03125
  %v627 = vmul.f32 %v592, 0.03125
  %v628 = vmul.f32 %v594, 0.03125
  %v629 = vmul.f32 %v596, 0.03125
  %v630 = vmul.f32 %v598, 0.03125
  %v631 = vmul.f32 %v471, %v471
  %v632 = vmul.f32 %v472, %v472
  %v633 = vmul.f32 %v473, %v473
  %v634 = vmul.f32 %v474, %v474
  %v635 = vmul.f32 %v475, %v475
  %v636 = vmul.f32 %v476, %v476
  %v637 = vmul.f32 %v477, %v477
  %v638 = vmul.f32 %v478, %v478
  %v639 = vmul.f32 %v479, %v479
  %v640 = vmul.f32 %v480, %v480
  %v641 = vmul.f32 %v481, %v481
  %v642 = vmul.f32 %v482, %v482
  %v643 = vmul.f32 %v483, %v483
  %v644 = vmul.f32 %v484, %v484
  %v645 = vmul.f32 %v485, %v485
  %v646 = vmul.f32 %v486, %v486
  %v647 = vmul.f32 %v487, %v487
  %v648 = vmul.f32 %v488, %v488
  %v649 = vmul.f32 %v489, %v489
  %v650 = vmul.f32 %v490, %v490
  %v651 = vmul.f32 %v491, %v491
  %v652 = vmul.f32 %v492, %v492
  %v653 = vmul.f32 %v493, %v493
  %v654 = vmul.f32 %v494, %v494
  %v655 = vmul.f32 %v495, %v495
  %v656 = vmul.f32 %v496, %v496
  %v657 = vmul.f32 %v497, %v497
  %v658 = vmul.f32 %v498, %v498
  %v659 = vmul.f32 %v499, %v499
  %v660 = vmul.f32 %v500, %v500
  %v661 = vmul.f32 %v501, %v501
  %v662 = vmul.f32 %v502, %v502
  %v663 = vsub.f32 %v599, %v631
  %v664 = vsub.f32 %v600, %v632
  %v665 = vsub.f32 %v601, %v633
  %v666 = vsub.f32 %v602, %v634
  %v667 = vsub.f32 %v603, %v635
  %v668 = vsub.f32 %v604, %v636
  %v669 = vsub.f32 %v605, %v637
  %v670 = vsub.f32 %v606, %v638
  %v671 = vsub.f32 %v607, %v639
  %v672 = vsub.f32 %v608, %v640
  %v673 = vsub.f32 %v609, %v641
  %v674 = vsub.f32 %v610, %v642
  %v675 = vsub.f32 %v611, %v643
  %v676 = vsub.f32 %v612, %v644
  %v677 = vsub.f32 %v613, %v645
  %v678 = vsub.f32 %v614, %v646
  %v679 = vsub.f32 %v615, %v647
  %v680 = vsub.f32 %v616, %v648
  %v681 = vsub.f32 %v617, %v649
  %v682 = vsub.f32 %v618, %v650
  %v683 = vsub.f32 %v619, %v651
  %v684 = vsub.f32 %v620, %v652
  %v685 = vsub.f32 %v621, %v653
  %v686 = vsub.f32 %v622, %v654
  %v687 = vsub.f32 %v623, %v655
  %v688 = vsub.f32 %v624, %v656
  %v689 = vsub.f32 %v625, %v657
  %v690 = vsub.f32 %v626, %v658
  %v691 = vsub.f32 %v627, %v659
  %v692 = vsub.f32 %v628, %v660
  %v693 = vsub.f32 %v629, %v661
  %v694 = vsub.f32 %v630, %v662
  %v695 = vmax.f32 %v663, 0.0
  %v696 = vmax.f32 %v664, 0.0
  %v697 = vmax.f32 %v665, 0.0
  %v698 = vmax.f32 %v666, 0.0
  %v699 = vmax.f32 %v667, 0.0
  %v700 = vmax.f32 %v668, 0.0
  %v701 = vmax.f32 %v669, 0.0
  %v702 = vmax.f32 %v670, 0.0
  %v703 = vmax.f32 %v671, 0.0
  %v704 = vmax.f32 %v672, 0.0
  %v705 = vmax.f32 %v673, 0.0
  %v706 = vmax.f32 %v674, 0.0
  %v707 = vmax.f32 %v675, 0.0
  %v708 = vmax.f32 %v676, 0.0
  %v709 = vmax.f32 %v677, 0.0
  %v710 = vmax.f32 %v678, 0.0
  %v711 = vmax.f32 %v679, 0.0
  %v712 = vmax.f32 %v680, 0.0
  %v713 = vmax.f32 %v681, 0.0
  %v714 = vmax.f32 %v682, 0.0
  %v715 = vmax.f32 %v683, 0.0
  %v716 = vmax.f32 %v684, 0.0
  %v717 = vmax.f32 %v685, 0.0
  %v718 = vmax.f32 %v686, 0.0
  %v719 = vmax.f32 %v687, 0.0
  %v720 = vmax.f32 %v688, 0.0
  %v721 = vmax.f32 %v689, 0.0
  %v722 = vmax.f32 %v690, 0.0
  %v723 = vmax.f32 %v691, 0.0
  %v724 = vmax.f32 %v692, 0.0
  %v725 = vmax.f32 %v693, 0.0
  %v726 = vmax.f32 %v694, 0.0
  %v727 = vsub.f32 %v281, %v471
  %v728 = vsub.f32 %v284, %v472
  %v729 = vsub.f32 %v289, %v473
  %v730 = vsub.f32 %v292, %v474
  %v731 = vsub.f32 %v297, %v475
  %v732 = vsub.f32 %v300, %v476
  %v733 = vsub.f32 %v305, %v477
  %v734 = vsub.f32 %v308, %v478
  %v735 = vsub.f32 %v313, %v479
  %v736 = vsub.f32 %v316, %v480
  %v737 = vsub.f32 %v321, %v481
  %v738 = vsub.f32 %v324, %v482
  %v739 = vsub.f32 %v329, %v483
  %v740 = vsub.f32 %v332, %v484
  %v741 = vsub.f32 %v337, %v485
  %v742 = vsub.f32 %v340, %v486
  %v743 = vsub.f32 %v345, %v487
  %v744 = vsub.f32 %v348, %v488
  %v745 = vsub.f32 %v353, %v489
  %v746 = vsub.f32 %v356, %v490
  %v747 = vsub.f32 %v361, %v491
  %v748 = vsub.f32 %v364, %v492
  %v749 = vsub.f32 %v369, %v493
  %v750 = vsub.f32 %v372, %v494
  %v751 = vsub.f32 %v377, %v495
  %v752 = vsub.f32 %v380, %v496
  %v753 = vsub.f32 %v385, %v497
  %v754 = vsub.f32 %v388, %v498
  %v755 = vsub.f32 %v393, %v499
  %v756 = vsub.f32 %v396, %v500
  %v757 = vsub.f32 %v401, %v501
  %v758 = vsub.f32 %v404, %v502
  %v759 = vadd.f32 %v695, 1e-05
  %v760 = vadd.f32 %v696, 1e-05
  %v761 = vadd.f32 %v697, 1e-05
  %v762 = vadd.f32 %v698, 1e-05
  %v763 = vadd.f32 %v699, 1e-05
  %v764 = vadd.f32 %v700, 1e-05
  %v765 = vadd.f32 %v701, 1e-05
  %v766 = vadd.f32 %v702, 1e-05
  %v767 = vadd.f32 %v703, 1e-05
  %v768 = vadd.f32 %v704, 1e-05
  %v769 = vadd.f32 %v705, 1e-05
  %v770 = vadd.f32 %v706, 1e-05
  %v771 = vadd.f32 %v707, 1e-05
  %v772 = vadd.f32 %v708, 1e-05
  %v773 = vadd.f32 %v709, 1e-05
  %v774 = vadd.f32 %v710, 1e-05
  %v775 = vadd.f32 %v711, 1e-05
  %v776 = vadd.f32 %v712, 1e-05
  %v777 = vadd.f32 %v713, 1e-05
  %v778 = vadd.f32 %v714, 1e-05
  %v779 = vadd.f32 %v715, 1e-05
  %v780 = vadd.f32 %v716, 1e-05
  %v781 = vadd.f32 %v717, 1e-05
  %v782 = vadd.f32 %v718, 1e-05
  %v783 = vadd.f32 %v719, 1e-05
  %v784 = vadd.f32 %v720, 1e-05
  %v785 = vadd.f32 %v721, 1e-05
  %v786 = vadd.f32 %v722, 1e-05
  %v787 = vadd.f32 %v723, 1e-05
  %v788 = vadd.f32 %v724, 1e-05
  %v789 = vadd.f32 %v725, 1e-05
  %v790 = vadd.f32 %v726, 1e-05
  %v791 = vrsqrt.pop %v759
  %v792 = vrsqrt.pop %v760
  %v793 = vrsqrt.pop %v761
  %v794 = vrsqrt.pop %v762
  %v795 = vrsqrt.pop %v763
  %v796 = vrsqrt.pop %v764
  %v797 = vrsqrt.pop %v765
  %v798 = vrsqrt.pop %v766
  %v799 = vrsqrt.pop %v767
  %v800 = vrsqrt.pop %v768
  %v801 = vrsqrt.pop %v769
  %v802 = vrsqrt.pop %v770
  %v803 = vrsqrt.pop %v771
  %v804 = vrsqrt.pop %v772
  %v805 = vrsqrt.pop %v773
  %v806 = vrsqrt.pop %v774
  %v807 = vrsqrt.pop %v775
  %v808 = vrsqrt.pop %v776
  %v809 = vrsqrt.pop %v777
  %v810 = vrsqrt.pop %v778
  %v811 = vrsqrt.pop %v779
  %v812 = vrsqrt.pop %v780
  %v813 = vrsqrt.pop %v781
  %v814 = vrsqrt.pop %v782
  %v815 = vrsqrt.pop %v783
  %v816 = vrsqrt.pop %v784
  %v817 = vrsqrt.pop %v785
  %v818 = vrsqrt.pop %v786
  %v819 = vrsqrt.pop %v787
  %v820 = vrsqrt.pop %v788
  %v821 = vrsqrt.pop %v789
  %v822 = vrsqrt.pop %v790
  %v823 = vmul.f32 %v727, %v791
  %v824 = vmul.f32 %v728, %v792
  %v825 = vmul.f32 %v729, %v793
  %v826 = vmul.f32 %v730, %v794
  %v827 = vmul.f32 %v731, %v795
  %v828 = vmul.f32 %v732, %v796
  %v829 = vmul.f32 %v733, %v797
  %v830 = vmul.f32 %v734, %v798
  %v831 = vmul.f32 %v735, %v799
  %v832 = vmul.f32 %v736, %v800
  %v833 = vmul.f32 %v737, %v801
  %v834 = vmul.f32 %v738, %v802
  %v835 = vmul.f32 %v739, %v803
  %v836 = vmul.f32 %v740, %v804
  %v837 = vmul.f32 %v741, %v805
  %v838 = vmul.f32 %v742, %v806
  %v839 = vmul.f32 %v743, %v807
  %v840 = vmul.f32 %v744, %v808
  %v841 = vmul.f32 %v745, %v809
  %v842 = vmul.f32 %v746, %v810
  %v843 = vmul.f32 %v747, %v811
  %v844 = vmul.f32 %v748, %v812
  %v845 = vmul.f32 %v749, %v813
  %v846 = vmul.f32 %v750, %v814
  %v847 = vmul.f32 %v751, %v815
  %v848 = vmul.f32 %v752, %v816
  %v849 = vmul.f32 %v753, %v817
  %v850 = vmul.f32 %v754, %v818
  %v851 = vmul.f32 %v755, %v819
  %v852 = vmul.f32 %v756, %v820
  %v853 = vmul.f32 %v757, %v821
  %v854 = vmul.f32 %v758, %v822
  %v855 = vld [vmem:[%s3] sm:$0x1]
  %v857 = vlaneseq
  %v858 = vshrl.u32 %v857, 7
  %v859 = vsub.s32 0, %v858
  %v860 = vrot.slane %v855, %v859
  %v862 = vmul.f32 %v823, %v860
  %v863 = vmul.f32 %v824, %v860
  %v864 = vmul.f32 %v825, %v860
  %v865 = vmul.f32 %v826, %v860
  %v866 = vmul.f32 %v827, %v860
  %v867 = vmul.f32 %v828, %v860
  %v868 = vmul.f32 %v829, %v860
  %v869 = vmul.f32 %v830, %v860
  %v870 = vmul.f32 %v831, %v860
  %v871 = vmul.f32 %v832, %v860
  %v872 = vmul.f32 %v833, %v860
  %v873 = vmul.f32 %v834, %v860
  %v874 = vmul.f32 %v835, %v860
  %v875 = vmul.f32 %v836, %v860
  %v876 = vmul.f32 %v837, %v860
  %v877 = vmul.f32 %v838, %v860
  %v878 = vmul.f32 %v839, %v860
  %v879 = vmul.f32 %v840, %v860
  %v880 = vmul.f32 %v841, %v860
  %v881 = vmul.f32 %v842, %v860
  %v882 = vmul.f32 %v843, %v860
  %v883 = vmul.f32 %v844, %v860
  %v884 = vmul.f32 %v845, %v860
  %v885 = vmul.f32 %v846, %v860
  %v886 = vmul.f32 %v847, %v860
  %v887 = vmul.f32 %v848, %v860
  %v888 = vmul.f32 %v849, %v860
  %v889 = vmul.f32 %v850, %v860
  %v890 = vmul.f32 %v851, %v860
  %v891 = vmul.f32 %v852, %v860
  %v892 = vmul.f32 %v853, %v860
  %v893 = vmul.f32 %v854, %v860
  %v894 = vld [vmem:[%s4] sm:$0x1]
  %v896 = vlaneseq
  %v897 = vshrl.u32 %v896, 7
  %v898 = vsub.s32 0, %v897
  %v899 = vrot.slane %v894, %v898
  %v901 = vadd.f32 %v862, %v899
  %v902 = vadd.f32 %v863, %v899
  %v903 = vadd.f32 %v864, %v899
  %v904 = vadd.f32 %v865, %v899
  %v905 = vadd.f32 %v866, %v899
  %v906 = vadd.f32 %v867, %v899
  %v907 = vadd.f32 %v868, %v899
  %v908 = vadd.f32 %v869, %v899
  %v909 = vadd.f32 %v870, %v899
  %v910 = vadd.f32 %v871, %v899
  %v911 = vadd.f32 %v872, %v899
  %v912 = vadd.f32 %v873, %v899
  %v913 = vadd.f32 %v874, %v899
  %v914 = vadd.f32 %v875, %v899
  %v915 = vadd.f32 %v876, %v899
  %v916 = vadd.f32 %v877, %v899
  %v917 = vadd.f32 %v878, %v899
  %v918 = vadd.f32 %v879, %v899
  %v919 = vadd.f32 %v880, %v899
  %v920 = vadd.f32 %v881, %v899
  %v921 = vadd.f32 %v882, %v899
  %v922 = vadd.f32 %v883, %v899
  %v923 = vadd.f32 %v884, %v899
  %v924 = vadd.f32 %v885, %v899
  %v925 = vadd.f32 %v886, %v899
  %v926 = vadd.f32 %v887, %v899
  %v927 = vadd.f32 %v888, %v899
  %v928 = vadd.f32 %v889, %v899
  %v929 = vadd.f32 %v890, %v899
  %v930 = vadd.f32 %v891, %v899
  %v931 = vadd.f32 %v892, %v899
  %v932 = vadd.f32 %v893, %v899
  %v933 = vpack.c.bf16 %v902, %v901
  %v934 = vpack.c.bf16 %v904, %v903
  %v935 = vpack.c.bf16 %v906, %v905
  %v936 = vpack.c.bf16 %v908, %v907
  %v937 = vpack.c.bf16 %v910, %v909
  %v938 = vpack.c.bf16 %v912, %v911
  %v939 = vpack.c.bf16 %v914, %v913
  %v940 = vpack.c.bf16 %v916, %v915
  %v941 = vpack.c.bf16 %v918, %v917
  %v942 = vpack.c.bf16 %v920, %v919
  %v943 = vpack.c.bf16 %v922, %v921
  %v944 = vpack.c.bf16 %v924, %v923
  %v945 = vpack.c.bf16 %v926, %v925
  %v946 = vpack.c.bf16 %v928, %v927
  %v947 = vpack.c.bf16 %v930, %v929
  %v948 = vpack.c.bf16 %v932, %v931
  %v949 = vld [vmem:[%s5] sm:$0xf]
  %v950 = vld [vmem:[%s5 + $0x4] sm:$0xf]
  %v951 = vld [vmem:[%s5 + $0x8] sm:$0xf]
  %v952 = vld [vmem:[%s5 + $0xc] sm:$0xf]
  %v953 = vld [vmem:[%s5 + $0x10] sm:$0xf]
  %v954 = vld [vmem:[%s5 + $0x14] sm:$0xf]
  %v955 = vld [vmem:[%s5 + $0x18] sm:$0xf]
  %v956 = vld [vmem:[%s5 + $0x1c] sm:$0xf]
  %v957 = vld [vmem:[%s5 + $0x20] sm:$0xf]
  %v958 = vld [vmem:[%s5 + $0x24] sm:$0xf]
  %v959 = vld [vmem:[%s5 + $0x28] sm:$0xf]
  %v960 = vld [vmem:[%s5 + $0x2c] sm:$0xf]
  %v961 = vld [vmem:[%s5 + $0x30] sm:$0xf]
  %v962 = vld [vmem:[%s5 + $0x34] sm:$0xf]
  %v963 = vld [vmem:[%s5 + $0x38] sm:$0xf]
  %v964 = vld [vmem:[%s5 + $0x3c] sm:$0xf]
  %v965 = vld [vmem:[%s6] sm:$0x1]
  %v967 = vlaneseq
  %v968 = vshrl.u32 %v967, 7
  %v969 = vsub.s32 0, %v968
  %v970 = vrot.slane %v965, %v969
  %v988 = vunpack.c.l.b16 %v949
  %v989 = vunpack.c.l.b16 %v950
  %v990 = vunpack.c.l.b16 %v951
  %v991 = vunpack.c.l.b16 %v952
  %v992 = vunpack.c.l.b16 %v953
  %v993 = vunpack.c.l.b16 %v954
  %v994 = vunpack.c.l.b16 %v955
  %v995 = vunpack.c.l.b16 %v956
  %v996 = vunpack.c.l.b16 %v957
  %v997 = vunpack.c.l.b16 %v958
  %v998 = vunpack.c.l.b16 %v959
  %v999 = vunpack.c.l.b16 %v960
  %v1000 = vunpack.c.l.b16 %v961
  %v1001 = vunpack.c.l.b16 %v962
  %v1002 = vunpack.c.l.b16 %v963
  %v1003 = vunpack.c.l.b16 %v964
  %v1004 = vpack.c.b16 %v989, %v988
  %v1005 = vpack.c.b16 %v991, %v990
  %v1006 = vpack.c.b16 %v993, %v992
  %v1007 = vpack.c.b16 %v995, %v994
  %v1008 = vpack.c.b16 %v997, %v996
  %v1009 = vpack.c.b16 %v999, %v998
  %v1010 = vpack.c.b16 %v1001, %v1000
  %v1011 = vpack.c.b16 %v1003, %v1002
  %1020 = vmatprep.subr.bf16.mxu0 0
  %1021 = vmatpush1.bf16.msra.mxu0 %v1004
  %1022 = vmatprep.subr.bf16.mxu0 0
  %1023 = vmatpush1.bf16.msra.mxu0 %v1005
  %1024 = vmatprep.subr.bf16.mxu0 0
  %1025 = vmatpush1.bf16.msra.mxu0 %v1006
  %1026 = vmatprep.subr.bf16.mxu0 0
  %1027 = vmatpush1.bf16.msra.mxu0 %v1007
  %1028 = vmatprep.subr.bf16.mxu0 0
  %1029 = vmatpush1.bf16.msra.mxu0 %v1008
  %1030 = vmatprep.subr.bf16.mxu0 0
  %1031 = vmatpush1.bf16.msra.mxu0 %v1009
  %1032 = vmatprep.subr.bf16.mxu0 0
  %1033 = vmatpush1.bf16.msra.mxu0 %v1010
  %1034 = vmatprep.subr.bf16.mxu0 0
  %1035 = vmatpush1.bf16.msra.mxu0 %v1011
  %1036 = vmatprep.subr.bf16.mxu0 0
  %1037 = vmatpush1.bf16.msra.mxu0 0
  %1038 = vmatprep.subr.bf16.mxu0 0
  %1039 = vmatpush1.bf16.msra.mxu0 0
  %1040 = vmatprep.subr.bf16.mxu0 0
  %1041 = vmatpush1.bf16.msra.mxu0 0
  %1042 = vmatprep.subr.bf16.mxu0 0
  %1043 = vmatpush1.bf16.msra.mxu0 0
  %1044 = vmatprep.subr.bf16.mxu0 0
  %1045 = vmatpush1.bf16.msra.mxu0 0
  %1046 = vmatprep.subr.bf16.mxu0 0
  %1047 = vmatpush1.bf16.msra.mxu0 0
  %1048 = vmatprep.subr.bf16.mxu0 0
  %1049 = vmatpush1.bf16.msra.mxu0 0
  %1050 = vmatprep.subr.bf16.mxu0 0
  %1051 = vmatpush1.bf16.msra.mxu0 0
  %1052 = vmatprep.mubr.bf16.mxu0 0
  %1053 = vmatmul.mubr.bf16.gmra.mrb[0].mxu0 %v933
  %v1054 = vpop.f32.mrb[0].mxu0
  %v1055 = vadd.f32 %v970, %v1054
  %v1056 = vpop.f32.mrb[0].mxu0
  %v1057 = vpop.f32.mrb[0].mxu0
  %v1058 = vadd.f32 %v970, %v1057
  %v1059 = vpop.f32.mrb[0].mxu0
  %1060 = vmatprep.mubr.bf16.mxu0 0
  %1061 = vmatmul.mubr.bf16.gmra.mrb[0].mxu0 %v934
  %v1062 = vpop.f32.mrb[0].mxu0
  %v1063 = vadd.f32 %v970, %v1062
  %v1064 = vpop.f32.mrb[0].mxu0
  %v1065 = vpop.f32.mrb[0].mxu0
  %v1066 = vadd.f32 %v970, %v1065
  %v1067 = vpop.f32.mrb[0].mxu0
  %1068 = vmatprep.mubr.bf16.mxu0 0
  %1069 = vmatmul.mubr.bf16.gmra.mrb[0].mxu0 %v935
  %v1070 = vpop.f32.mrb[0].mxu0
  %v1071 = vadd.f32 %v970, %v1070
  %v1072 = vpop.f32.mrb[0].mxu0
  %v1073 = vpop.f32.mrb[0].mxu0
  %v1074 = vadd.f32 %v970, %v1073
  %v1075 = vpop.f32.mrb[0].mxu0
  %1076 = vmatprep.mubr.bf16.mxu0 0
  %1077 = vmatmul.mubr.bf16.gmra.mrb[0].mxu0 %v936
  %v1078 = vpop.f32.mrb[0].mxu0
  %v1079 = vadd.f32 %v970, %v1078
  %v1080 = vpop.f32.mrb[0].mxu0
  %v1081 = vpop.f32.mrb[0].mxu0
  %v1082 = vadd.f32 %v970, %v1081
  %v1083 = vpop.f32.mrb[0].mxu0
  %1084 = vmatprep.mubr.bf16.mxu0 0
  %1085 = vmatmul.mubr.bf16.gmra.mrb[0].mxu0 %v937
  %v1086 = vpop.f32.mrb[0].mxu0
  %v1087 = vadd.f32 %v970, %v1086
  %v1088 = vpop.f32.mrb[0].mxu0
  %v1089 = vpop.f32.mrb[0].mxu0
  %v1090 = vadd.f32 %v970, %v1089
  %v1091 = vpop.f32.mrb[0].mxu0
  %1092 = vmatprep.mubr.bf16.mxu0 0
  %1093 = vmatmul.mubr.bf16.gmra.mrb[0].mxu0 %v938
  %v1094 = vpop.f32.mrb[0].mxu0
  %v1095 = vadd.f32 %v970, %v1094
  %v1096 = vpop.f32.mrb[0].mxu0
  %v1097 = vpop.f32.mrb[0].mxu0
  %v1098 = vadd.f32 %v970, %v1097
  %v1099 = vpop.f32.mrb[0].mxu0
  %1100 = vmatprep.mubr.bf16.mxu0 0
  %1101 = vmatmul.mubr.bf16.gmra.mrb[0].mxu0 %v939
  %v1102 = vpop.f32.mrb[0].mxu0
  %v1103 = vadd.f32 %v970, %v1102
  %v1104 = vpop.f32.mrb[0].mxu0
  %v1105 = vpop.f32.mrb[0].mxu0
  %v1106 = vadd.f32 %v970, %v1105
  %v1107 = vpop.f32.mrb[0].mxu0
  %1108 = vmatprep.mubr.bf16.mxu0 0
  %1109 = vmatmul.mubr.bf16.gmra.mrb[0].mxu0 %v940
  %v1110 = vpop.f32.mrb[0].mxu0
  %v1111 = vadd.f32 %v970, %v1110
  %v1112 = vpop.f32.mrb[0].mxu0
  %v1113 = vpop.f32.mrb[0].mxu0
  %v1114 = vadd.f32 %v970, %v1113
  %v1115 = vpop.f32.mrb[0].mxu0
  %1116 = vmatprep.mubr.bf16.mxu0 0
  %1117 = vmatmul.mubr.bf16.gmra.mrb[0].mxu0 %v941
  %v1118 = vpop.f32.mrb[0].mxu0
  %v1119 = vadd.f32 %v970, %v1118
  %v1120 = vpop.f32.mrb[0].mxu0
  %v1121 = vpop.f32.mrb[0].mxu0
  %v1122 = vadd.f32 %v970, %v1121
  %v1123 = vpop.f32.mrb[0].mxu0
  %1124 = vmatprep.mubr.bf16.mxu0 0
  %1125 = vmatmul.mubr.bf16.gmra.mrb[0].mxu0 %v942
  %v1126 = vpop.f32.mrb[0].mxu0
  %v1127 = vadd.f32 %v970, %v1126
  %v1128 = vpop.f32.mrb[0].mxu0
  %v1129 = vpop.f32.mrb[0].mxu0
  %v1130 = vadd.f32 %v970, %v1129
  %v1131 = vpop.f32.mrb[0].mxu0
  %1132 = vmatprep.mubr.bf16.mxu0 0
  %1133 = vmatmul.mubr.bf16.gmra.mrb[0].mxu0 %v943
  %v1134 = vpop.f32.mrb[0].mxu0
  %v1135 = vadd.f32 %v970, %v1134
  %v1136 = vpop.f32.mrb[0].mxu0
  %v1137 = vpop.f32.mrb[0].mxu0
  %v1138 = vadd.f32 %v970, %v1137
  %v1139 = vpop.f32.mrb[0].mxu0
  %1140 = vmatprep.mubr.bf16.mxu0 0
  %1141 = vmatmul.mubr.bf16.gmra.mrb[0].mxu0 %v944
  %v1142 = vpop.f32.mrb[0].mxu0
  %v1143 = vadd.f32 %v970, %v1142
  %v1144 = vpop.f32.mrb[0].mxu0
  %v1145 = vpop.f32.mrb[0].mxu0
  %v1146 = vadd.f32 %v970, %v1145
  %v1147 = vpop.f32.mrb[0].mxu0
  %1148 = vmatprep.mubr.bf16.mxu0 0
  %1149 = vmatmul.mubr.bf16.gmra.mrb[0].mxu0 %v945
  %v1150 = vpop.f32.mrb[0].mxu0
  %v1151 = vadd.f32 %v970, %v1150
  %v1152 = vpop.f32.mrb[0].mxu0
  %v1153 = vpop.f32.mrb[0].mxu0
  %v1154 = vadd.f32 %v970, %v1153
  %v1155 = vpop.f32.mrb[0].mxu0
  %1156 = vmatprep.mubr.bf16.mxu0 0
  %1157 = vmatmul.mubr.bf16.gmra.mrb[0].mxu0 %v946
  %v1158 = vpop.f32.mrb[0].mxu0
  %v1159 = vadd.f32 %v970, %v1158
  %v1160 = vpop.f32.mrb[0].mxu0
  %v1161 = vpop.f32.mrb[0].mxu0
  %v1162 = vadd.f32 %v970, %v1161
  %v1163 = vpop.f32.mrb[0].mxu0
  %1164 = vmatprep.mubr.bf16.mxu0 0
  %1165 = vmatmul.mubr.bf16.gmra.mrb[0].mxu0 %v947
  %v1166 = vpop.f32.mrb[0].mxu0
  %v1167 = vadd.f32 %v970, %v1166
  %v1168 = vpop.f32.mrb[0].mxu0
  %v1169 = vpop.f32.mrb[0].mxu0
  %v1170 = vadd.f32 %v970, %v1169
  %v1171 = vpop.f32.mrb[0].mxu0
  %1172 = vmatprep.mubr.bf16.mxu0 0
  %1173 = vmatmul.mubr.bf16.gmra.mrb[0].mxu0 %v948
  %v1174 = vpop.f32.mrb[0].mxu0
  %v1175 = vadd.f32 %v970, %v1174
  %v1176 = vpop.f32.mrb[0].mxu0
  %v1177 = vpop.f32.mrb[0].mxu0
  %v1178 = vadd.f32 %v970, %v1177
  %v1179 = vpop.f32.mrb[0].mxu0
  %1180 = vdwg.mxu0
  %v1181 = vmul.f32 %v1055, 0.5
  %v1182 = vmul.f32 %v1058, 0.5
  %v1183 = vmul.f32 %v1063, 0.5
  %v1184 = vmul.f32 %v1066, 0.5
  %v1185 = vmul.f32 %v1071, 0.5
  %v1186 = vmul.f32 %v1074, 0.5
  %v1187 = vmul.f32 %v1079, 0.5
  %v1188 = vmul.f32 %v1082, 0.5
  %v1189 = vmul.f32 %v1087, 0.5
  %v1190 = vmul.f32 %v1090, 0.5
  %v1191 = vmul.f32 %v1095, 0.5
  %v1192 = vmul.f32 %v1098, 0.5
  %v1193 = vmul.f32 %v1103, 0.5
  %v1194 = vmul.f32 %v1106, 0.5
  %v1195 = vmul.f32 %v1111, 0.5
  %v1196 = vmul.f32 %v1114, 0.5
  %v1197 = vmul.f32 %v1119, 0.5
  %v1198 = vmul.f32 %v1122, 0.5
  %v1199 = vmul.f32 %v1127, 0.5
  %v1200 = vmul.f32 %v1130, 0.5
  %v1201 = vmul.f32 %v1135, 0.5
  %v1202 = vmul.f32 %v1138, 0.5
  %v1203 = vmul.f32 %v1143, 0.5
  %v1204 = vmul.f32 %v1146, 0.5
  %v1205 = vmul.f32 %v1151, 0.5
  %v1206 = vmul.f32 %v1154, 0.5
  %v1207 = vmul.f32 %v1159, 0.5
  %v1208 = vmul.f32 %v1162, 0.5
  %v1209 = vmul.f32 %v1167, 0.5
  %v1210 = vmul.f32 %v1170, 0.5
  %v1211 = vmul.f32 %v1175, 0.5
  %v1212 = vmul.f32 %v1178, 0.5
  %v1213 = vmul.f32 %v1055, 0.044715
  %v1214 = vmul.f32 %v1058, 0.044715
  %v1215 = vmul.f32 %v1063, 0.044715
  %v1216 = vmul.f32 %v1066, 0.044715
  %v1217 = vmul.f32 %v1071, 0.044715
  %v1218 = vmul.f32 %v1074, 0.044715
  %v1219 = vmul.f32 %v1079, 0.044715
  %v1220 = vmul.f32 %v1082, 0.044715
  %v1221 = vmul.f32 %v1087, 0.044715
  %v1222 = vmul.f32 %v1090, 0.044715
  %v1223 = vmul.f32 %v1095, 0.044715
  %v1224 = vmul.f32 %v1098, 0.044715
  %v1225 = vmul.f32 %v1103, 0.044715
  %v1226 = vmul.f32 %v1106, 0.044715
  %v1227 = vmul.f32 %v1111, 0.044715
  %v1228 = vmul.f32 %v1114, 0.044715
  %v1229 = vmul.f32 %v1119, 0.044715
  %v1230 = vmul.f32 %v1122, 0.044715
  %v1231 = vmul.f32 %v1127, 0.044715
  %v1232 = vmul.f32 %v1130, 0.044715
  %v1233 = vmul.f32 %v1135, 0.044715
  %v1234 = vmul.f32 %v1138, 0.044715
  %v1235 = vmul.f32 %v1143, 0.044715
  %v1236 = vmul.f32 %v1146, 0.044715
  %v1237 = vmul.f32 %v1151, 0.044715
  %v1238 = vmul.f32 %v1154, 0.044715
  %v1239 = vmul.f32 %v1159, 0.044715
  %v1240 = vmul.f32 %v1162, 0.044715
  %v1241 = vmul.f32 %v1167, 0.044715
  %v1242 = vmul.f32 %v1170, 0.044715
  %v1243 = vmul.f32 %v1175, 0.044715
  %v1244 = vmul.f32 %v1178, 0.044715
  %v1245 = vmul.f32 %v1213, %v1055
  %v1246 = vmul.f32 %v1214, %v1058
  %v1247 = vmul.f32 %v1215, %v1063
  %v1248 = vmul.f32 %v1216, %v1066
  %v1249 = vmul.f32 %v1217, %v1071
  %v1250 = vmul.f32 %v1218, %v1074
  %v1251 = vmul.f32 %v1219, %v1079
  %v1252 = vmul.f32 %v1220, %v1082
  %v1253 = vmul.f32 %v1221, %v1087
  %v1254 = vmul.f32 %v1222, %v1090
  %v1255 = vmul.f32 %v1223, %v1095
  %v1256 = vmul.f32 %v1224, %v1098
  %v1257 = vmul.f32 %v1225, %v1103
  %v1258 = vmul.f32 %v1226, %v1106
  %v1259 = vmul.f32 %v1227, %v1111
  %v1260 = vmul.f32 %v1228, %v1114
  %v1261 = vmul.f32 %v1229, %v1119
  %v1262 = vmul.f32 %v1230, %v1122
  %v1263 = vmul.f32 %v1231, %v1127
  %v1264 = vmul.f32 %v1232, %v1130
  %v1265 = vmul.f32 %v1233, %v1135
  %v1266 = vmul.f32 %v1234, %v1138
  %v1267 = vmul.f32 %v1235, %v1143
  %v1268 = vmul.f32 %v1236, %v1146
  %v1269 = vmul.f32 %v1237, %v1151
  %v1270 = vmul.f32 %v1238, %v1154
  %v1271 = vmul.f32 %v1239, %v1159
  %v1272 = vmul.f32 %v1240, %v1162
  %v1273 = vmul.f32 %v1241, %v1167
  %v1274 = vmul.f32 %v1242, %v1170
  %v1275 = vmul.f32 %v1243, %v1175
  %v1276 = vmul.f32 %v1244, %v1178
  %v1277 = vmul.f32 %v1245, %v1055
  %v1278 = vmul.f32 %v1246, %v1058
  %v1279 = vmul.f32 %v1247, %v1063
  %v1280 = vmul.f32 %v1248, %v1066
  %v1281 = vmul.f32 %v1249, %v1071
  %v1282 = vmul.f32 %v1250, %v1074
  %v1283 = vmul.f32 %v1251, %v1079
  %v1284 = vmul.f32 %v1252, %v1082
  %v1285 = vmul.f32 %v1253, %v1087
  %v1286 = vmul.f32 %v1254, %v1090
  %v1287 = vmul.f32 %v1255, %v1095
  %v1288 = vmul.f32 %v1256, %v1098
  %v1289 = vmul.f32 %v1257, %v1103
  %v1290 = vmul.f32 %v1258, %v1106
  %v1291 = vmul.f32 %v1259, %v1111
  %v1292 = vmul.f32 %v1260, %v1114
  %v1293 = vmul.f32 %v1261, %v1119
  %v1294 = vmul.f32 %v1262, %v1122
  %v1295 = vmul.f32 %v1263, %v1127
  %v1296 = vmul.f32 %v1264, %v1130
  %v1297 = vmul.f32 %v1265, %v1135
  %v1298 = vmul.f32 %v1266, %v1138
  %v1299 = vmul.f32 %v1267, %v1143
  %v1300 = vmul.f32 %v1268, %v1146
  %v1301 = vmul.f32 %v1269, %v1151
  %v1302 = vmul.f32 %v1270, %v1154
  %v1303 = vmul.f32 %v1271, %v1159
  %v1304 = vmul.f32 %v1272, %v1162
  %v1305 = vmul.f32 %v1273, %v1167
  %v1306 = vmul.f32 %v1274, %v1170
  %v1307 = vmul.f32 %v1275, %v1175
  %v1308 = vmul.f32 %v1276, %v1178
  %v1309 = vadd.f32 %v1055, %v1277
  %v1310 = vadd.f32 %v1058, %v1278
  %v1311 = vadd.f32 %v1063, %v1279
  %v1312 = vadd.f32 %v1066, %v1280
  %v1313 = vadd.f32 %v1071, %v1281
  %v1314 = vadd.f32 %v1074, %v1282
  %v1315 = vadd.f32 %v1079, %v1283
  %v1316 = vadd.f32 %v1082, %v1284
  %v1317 = vadd.f32 %v1087, %v1285
  %v1318 = vadd.f32 %v1090, %v1286
  %v1319 = vadd.f32 %v1095, %v1287
  %v1320 = vadd.f32 %v1098, %v1288
  %v1321 = vadd.f32 %v1103, %v1289
  %v1322 = vadd.f32 %v1106, %v1290
  %v1323 = vadd.f32 %v1111, %v1291
  %v1324 = vadd.f32 %v1114, %v1292
  %v1325 = vadd.f32 %v1119, %v1293
  %v1326 = vadd.f32 %v1122, %v1294
  %v1327 = vadd.f32 %v1127, %v1295
  %v1328 = vadd.f32 %v1130, %v1296
  %v1329 = vadd.f32 %v1135, %v1297
  %v1330 = vadd.f32 %v1138, %v1298
  %v1331 = vadd.f32 %v1143, %v1299
  %v1332 = vadd.f32 %v1146, %v1300
  %v1333 = vadd.f32 %v1151, %v1301
  %v1334 = vadd.f32 %v1154, %v1302
  %v1335 = vadd.f32 %v1159, %v1303
  %v1336 = vadd.f32 %v1162, %v1304
  %v1337 = vadd.f32 %v1167, %v1305
  %v1338 = vadd.f32 %v1170, %v1306
  %v1339 = vadd.f32 %v1175, %v1307
  %v1340 = vadd.f32 %v1178, %v1308
  %v1341 = vmul.f32 %v1309, 0.7978846
  %v1342 = vmul.f32 %v1310, 0.7978846
  %v1343 = vmul.f32 %v1311, 0.7978846
  %v1344 = vmul.f32 %v1312, 0.7978846
  %v1345 = vmul.f32 %v1313, 0.7978846
  %v1346 = vmul.f32 %v1314, 0.7978846
  %v1347 = vmul.f32 %v1315, 0.7978846
  %v1348 = vmul.f32 %v1316, 0.7978846
  %v1349 = vmul.f32 %v1317, 0.7978846
  %v1350 = vmul.f32 %v1318, 0.7978846
  %v1351 = vmul.f32 %v1319, 0.7978846
  %v1352 = vmul.f32 %v1320, 0.7978846
  %v1353 = vmul.f32 %v1321, 0.7978846
  %v1354 = vmul.f32 %v1322, 0.7978846
  %v1355 = vmul.f32 %v1323, 0.7978846
  %v1356 = vmul.f32 %v1324, 0.7978846
  %v1357 = vmul.f32 %v1325, 0.7978846
  %v1358 = vmul.f32 %v1326, 0.7978846
  %v1359 = vmul.f32 %v1327, 0.7978846
  %v1360 = vmul.f32 %v1328, 0.7978846
  %v1361 = vmul.f32 %v1329, 0.7978846
  %v1362 = vmul.f32 %v1330, 0.7978846
  %v1363 = vmul.f32 %v1331, 0.7978846
  %v1364 = vmul.f32 %v1332, 0.7978846
  %v1365 = vmul.f32 %v1333, 0.7978846
  %v1366 = vmul.f32 %v1334, 0.7978846
  %v1367 = vmul.f32 %v1335, 0.7978846
  %v1368 = vmul.f32 %v1336, 0.7978846
  %v1369 = vmul.f32 %v1337, 0.7978846
  %v1370 = vmul.f32 %v1338, 0.7978846
  %v1371 = vmul.f32 %v1339, 0.7978846
  %v1372 = vmul.f32 %v1340, 0.7978846
  %v1373 = vtanh.pop %v1341
  %v1374 = vtanh.pop %v1342
  %v1375 = vtanh.pop %v1343
  %v1376 = vtanh.pop %v1344
  %v1377 = vtanh.pop %v1345
  %v1378 = vtanh.pop %v1346
  %v1379 = vtanh.pop %v1347
  %v1380 = vtanh.pop %v1348
  %v1381 = vtanh.pop %v1349
  %v1382 = vtanh.pop %v1350
  %v1383 = vtanh.pop %v1351
  %v1384 = vtanh.pop %v1352
  %v1385 = vtanh.pop %v1353
  %v1386 = vtanh.pop %v1354
  %v1387 = vtanh.pop %v1355
  %v1388 = vtanh.pop %v1356
  %v1389 = vtanh.pop %v1357
  %v1390 = vtanh.pop %v1358
  %v1391 = vtanh.pop %v1359
  %v1392 = vtanh.pop %v1360
  %v1393 = vtanh.pop %v1361
  %v1394 = vtanh.pop %v1362
  %v1395 = vtanh.pop %v1363
  %v1396 = vtanh.pop %v1364
  %v1397 = vtanh.pop %v1365
  %v1398 = vtanh.pop %v1366
  %v1399 = vtanh.pop %v1367
  %v1400 = vtanh.pop %v1368
  %v1401 = vtanh.pop %v1369
  %v1402 = vtanh.pop %v1370
  %v1403 = vtanh.pop %v1371
  %v1404 = vtanh.pop %v1372
  %v1405 = vadd.f32 %v1373, 1.0
  %v1406 = vadd.f32 %v1374, 1.0
  %v1407 = vadd.f32 %v1375, 1.0
  %v1408 = vadd.f32 %v1376, 1.0
  %v1409 = vadd.f32 %v1377, 1.0
  %v1410 = vadd.f32 %v1378, 1.0
  %v1411 = vadd.f32 %v1379, 1.0
  %v1412 = vadd.f32 %v1380, 1.0
  %v1413 = vadd.f32 %v1381, 1.0
  %v1414 = vadd.f32 %v1382, 1.0
  %v1415 = vadd.f32 %v1383, 1.0
  %v1416 = vadd.f32 %v1384, 1.0
  %v1417 = vadd.f32 %v1385, 1.0
  %v1418 = vadd.f32 %v1386, 1.0
  %v1419 = vadd.f32 %v1387, 1.0
  %v1420 = vadd.f32 %v1388, 1.0
  %v1421 = vadd.f32 %v1389, 1.0
  %v1422 = vadd.f32 %v1390, 1.0
  %v1423 = vadd.f32 %v1391, 1.0
  %v1424 = vadd.f32 %v1392, 1.0
  %v1425 = vadd.f32 %v1393, 1.0
  %v1426 = vadd.f32 %v1394, 1.0
  %v1427 = vadd.f32 %v1395, 1.0
  %v1428 = vadd.f32 %v1396, 1.0
  %v1429 = vadd.f32 %v1397, 1.0
  %v1430 = vadd.f32 %v1398, 1.0
  %v1431 = vadd.f32 %v1399, 1.0
  %v1432 = vadd.f32 %v1400, 1.0
  %v1433 = vadd.f32 %v1401, 1.0
  %v1434 = vadd.f32 %v1402, 1.0
  %v1435 = vadd.f32 %v1403, 1.0
  %v1436 = vadd.f32 %v1404, 1.0
  %v1437 = vmul.f32 %v1181, %v1405
  %v1438 = vmul.f32 %v1182, %v1406
  %v1439 = vmul.f32 %v1183, %v1407
  %v1440 = vmul.f32 %v1184, %v1408
  %v1441 = vmul.f32 %v1185, %v1409
  %v1442 = vmul.f32 %v1186, %v1410
  %v1443 = vmul.f32 %v1187, %v1411
  %v1444 = vmul.f32 %v1188, %v1412
  %v1445 = vmul.f32 %v1189, %v1413
  %v1446 = vmul.f32 %v1190, %v1414
  %v1447 = vmul.f32 %v1191, %v1415
  %v1448 = vmul.f32 %v1192, %v1416
  %v1449 = vmul.f32 %v1193, %v1417
  %v1450 = vmul.f32 %v1194, %v1418
  %v1451 = vmul.f32 %v1195, %v1419
  %v1452 = vmul.f32 %v1196, %v1420
  %v1453 = vmul.f32 %v1197, %v1421
  %v1454 = vmul.f32 %v1198, %v1422
  %v1455 = vmul.f32 %v1199, %v1423
  %v1456 = vmul.f32 %v1200, %v1424
  %v1457 = vmul.f32 %v1201, %v1425
  %v1458 = vmul.f32 %v1202, %v1426
  %v1459 = vmul.f32 %v1203, %v1427
  %v1460 = vmul.f32 %v1204, %v1428
  %v1461 = vmul.f32 %v1205, %v1429
  %v1462 = vmul.f32 %v1206, %v1430
  %v1463 = vmul.f32 %v1207, %v1431
  %v1464 = vmul.f32 %v1208, %v1432
  %v1465 = vmul.f32 %v1209, %v1433
  %v1466 = vmul.f32 %v1210, %v1434
  %v1467 = vmul.f32 %v1211, %v1435
  %v1468 = vmul.f32 %v1212, %v1436
  %v1469 = vpack.c.bf16 %v1438, %v1437
  %v1470 = vpack.c.bf16 %v1440, %v1439
  %v1471 = vpack.c.bf16 %v1442, %v1441
  %v1472 = vpack.c.bf16 %v1444, %v1443
  %v1473 = vpack.c.bf16 %v1446, %v1445
  %v1474 = vpack.c.bf16 %v1448, %v1447
  %v1475 = vpack.c.bf16 %v1450, %v1449
  %v1476 = vpack.c.bf16 %v1452, %v1451
  %v1477 = vpack.c.bf16 %v1454, %v1453
  %v1478 = vpack.c.bf16 %v1456, %v1455
  %v1479 = vpack.c.bf16 %v1458, %v1457
  %v1480 = vpack.c.bf16 %v1460, %v1459
  %v1481 = vpack.c.bf16 %v1462, %v1461
  %v1482 = vpack.c.bf16 %v1464, %v1463
  %v1483 = vpack.c.bf16 %v1466, %v1465
  %v1484 = vpack.c.bf16 %v1468, %v1467
  %v1485 = vld [vmem:[%s7] sm:$0xf]
  %v1486 = vld [vmem:[%s7 + $0x4] sm:$0xf]
  %v1487 = vld [vmem:[%s7 + $0x8] sm:$0xf]
  %v1488 = vld [vmem:[%s7 + $0xc] sm:$0xf]
  %v1489 = vld [vmem:[%s7 + $0x10] sm:$0xf]
  %v1490 = vld [vmem:[%s7 + $0x14] sm:$0xf]
  %v1491 = vld [vmem:[%s7 + $0x18] sm:$0xf]
  %v1492 = vld [vmem:[%s7 + $0x1c] sm:$0xf]
  %v1493 = vld [vmem:[%s7 + $0x20] sm:$0xf]
  %v1494 = vld [vmem:[%s7 + $0x24] sm:$0xf]
  %v1495 = vld [vmem:[%s7 + $0x28] sm:$0xf]
  %v1496 = vld [vmem:[%s7 + $0x2c] sm:$0xf]
  %v1497 = vld [vmem:[%s7 + $0x30] sm:$0xf]
  %v1498 = vld [vmem:[%s7 + $0x34] sm:$0xf]
  %v1499 = vld [vmem:[%s7 + $0x38] sm:$0xf]
  %v1500 = vld [vmem:[%s7 + $0x3c] sm:$0xf]
  %v1501 = vld [vmem:[%s8] sm:$0x1]
  %v1503 = vlaneseq
  %v1504 = vshrl.u32 %v1503, 7
  %v1505 = vsub.s32 0, %v1504
  %v1506 = vrot.slane %v1501, %v1505
  %v1524 = vunpack.c.l.b16 %v1485
  %v1525 = vunpack.c.l.b16 %v1486
  %v1526 = vunpack.c.l.b16 %v1487
  %v1527 = vunpack.c.l.b16 %v1488
  %v1528 = vunpack.c.l.b16 %v1489
  %v1529 = vunpack.c.l.b16 %v1490
  %v1530 = vunpack.c.l.b16 %v1491
  %v1531 = vunpack.c.l.b16 %v1492
  %v1532 = vunpack.c.l.b16 %v1493
  %v1533 = vunpack.c.l.b16 %v1494
  %v1534 = vunpack.c.l.b16 %v1495
  %v1535 = vunpack.c.l.b16 %v1496
  %v1536 = vunpack.c.l.b16 %v1497
  %v1537 = vunpack.c.l.b16 %v1498
  %v1538 = vunpack.c.l.b16 %v1499
  %v1539 = vunpack.c.l.b16 %v1500
  %v1540 = vpack.c.b16 %v1525, %v1524
  %v1541 = vpack.c.b16 %v1527, %v1526
  %v1542 = vpack.c.b16 %v1529, %v1528
  %v1543 = vpack.c.b16 %v1531, %v1530
  %v1544 = vpack.c.b16 %v1533, %v1532
  %v1545 = vpack.c.b16 %v1535, %v1534
  %v1546 = vpack.c.b16 %v1537, %v1536
  %v1547 = vpack.c.b16 %v1539, %v1538
  %1556 = vmatprep.subr.bf16.mxu0 0
  %1557 = vmatpush1.bf16.msra.mxu0 %v1540
  %1558 = vmatprep.subr.bf16.mxu0 0
  %1559 = vmatpush1.bf16.msra.mxu0 %v1541
  %1560 = vmatprep.subr.bf16.mxu0 0
  %1561 = vmatpush1.bf16.msra.mxu0 %v1542
  %1562 = vmatprep.subr.bf16.mxu0 0
  %1563 = vmatpush1.bf16.msra.mxu0 %v1543
  %1564 = vmatprep.subr.bf16.mxu0 0
  %1565 = vmatpush1.bf16.msra.mxu0 %v1544
  %1566 = vmatprep.subr.bf16.mxu0 0
  %1567 = vmatpush1.bf16.msra.mxu0 %v1545
  %1568 = vmatprep.subr.bf16.mxu0 0
  %1569 = vmatpush1.bf16.msra.mxu0 %v1546
  %1570 = vmatprep.subr.bf16.mxu0 0
  %1571 = vmatpush1.bf16.msra.mxu0 %v1547
  %1572 = vmatprep.subr.bf16.mxu0 0
  %1573 = vmatpush1.bf16.msra.mxu0 0
  %1574 = vmatprep.subr.bf16.mxu0 0
  %1575 = vmatpush1.bf16.msra.mxu0 0
  %1576 = vmatprep.subr.bf16.mxu0 0
  %1577 = vmatpush1.bf16.msra.mxu0 0
  %1578 = vmatprep.subr.bf16.mxu0 0
  %1579 = vmatpush1.bf16.msra.mxu0 0
  %1580 = vmatprep.subr.bf16.mxu0 0
  %1581 = vmatpush1.bf16.msra.mxu0 0
  %1582 = vmatprep.subr.bf16.mxu0 0
  %1583 = vmatpush1.bf16.msra.mxu0 0
  %1584 = vmatprep.subr.bf16.mxu0 0
  %1585 = vmatpush1.bf16.msra.mxu0 0
  %1586 = vmatprep.subr.bf16.mxu0 0
  %1587 = vmatpush1.bf16.msra.mxu0 0
  %1588 = vmatprep.mubr.bf16.mxu0 0
  %1589 = vmatmul.mubr.bf16.gmra.mrb[0].mxu0 %v1469
  %v1590 = vpop.f32.mrb[0].mxu0
  %v1591 = vadd.f32 %v1506, %v1590
  %v1592 = vpop.f32.mrb[0].mxu0
  %v1593 = vpop.f32.mrb[0].mxu0
  %v1594 = vadd.f32 %v1506, %v1593
  %v1595 = vpop.f32.mrb[0].mxu0
  %1596 = vmatprep.mubr.bf16.mxu0 0
  %1597 = vmatmul.mubr.bf16.gmra.mrb[0].mxu0 %v1470
  %v1598 = vpop.f32.mrb[0].mxu0
  %v1599 = vadd.f32 %v1506, %v1598
  %v1600 = vpop.f32.mrb[0].mxu0
  %v1601 = vpop.f32.mrb[0].mxu0
  %v1602 = vadd.f32 %v1506, %v1601
  %v1603 = vpop.f32.mrb[0].mxu0
  %1604 = vmatprep.mubr.bf16.mxu0 0
  %1605 = vmatmul.mubr.bf16.gmra.mrb[0].mxu0 %v1471
  %v1606 = vpop.f32.mrb[0].mxu0
  %v1607 = vadd.f32 %v1506, %v1606
  %v1608 = vpop.f32.mrb[0].mxu0
  %v1609 = vpop.f32.mrb[0].mxu0
  %v1610 = vadd.f32 %v1506, %v1609
  %v1611 = vpop.f32.mrb[0].mxu0
  %1612 = vmatprep.mubr.bf16.mxu0 0
  %1613 = vmatmul.mubr.bf16.gmra.mrb[0].mxu0 %v1472
  %v1614 = vpop.f32.mrb[0].mxu0
  %v1615 = vadd.f32 %v1506, %v1614
  %v1616 = vpop.f32.mrb[0].mxu0
  %v1617 = vpop.f32.mrb[0].mxu0
  %v1618 = vadd.f32 %v1506, %v1617
  %v1619 = vpop.f32.mrb[0].mxu0
  %1620 = vmatprep.mubr.bf16.mxu0 0
  %1621 = vmatmul.mubr.bf16.gmra.mrb[0].mxu0 %v1473
  %v1622 = vpop.f32.mrb[0].mxu0
  %v1623 = vadd.f32 %v1506, %v1622
  %v1624 = vpop.f32.mrb[0].mxu0
  %v1625 = vpop.f32.mrb[0].mxu0
  %v1626 = vadd.f32 %v1506, %v1625
  %v1627 = vpop.f32.mrb[0].mxu0
  %1628 = vmatprep.mubr.bf16.mxu0 0
  %1629 = vmatmul.mubr.bf16.gmra.mrb[0].mxu0 %v1474
  %v1630 = vpop.f32.mrb[0].mxu0
  %v1631 = vadd.f32 %v1506, %v1630
  %v1632 = vpop.f32.mrb[0].mxu0
  %v1633 = vpop.f32.mrb[0].mxu0
  %v1634 = vadd.f32 %v1506, %v1633
  %v1635 = vpop.f32.mrb[0].mxu0
  %1636 = vmatprep.mubr.bf16.mxu0 0
  %1637 = vmatmul.mubr.bf16.gmra.mrb[0].mxu0 %v1475
  %v1638 = vpop.f32.mrb[0].mxu0
  %v1639 = vadd.f32 %v1506, %v1638
  %v1640 = vpop.f32.mrb[0].mxu0
  %v1641 = vpop.f32.mrb[0].mxu0
  %v1642 = vadd.f32 %v1506, %v1641
  %v1643 = vpop.f32.mrb[0].mxu0
  %1644 = vmatprep.mubr.bf16.mxu0 0
  %1645 = vmatmul.mubr.bf16.gmra.mrb[0].mxu0 %v1476
  %v1646 = vpop.f32.mrb[0].mxu0
  %v1647 = vadd.f32 %v1506, %v1646
  %v1648 = vpop.f32.mrb[0].mxu0
  %v1649 = vpop.f32.mrb[0].mxu0
  %v1650 = vadd.f32 %v1506, %v1649
  %v1651 = vpop.f32.mrb[0].mxu0
  %1652 = vmatprep.mubr.bf16.mxu0 0
  %1653 = vmatmul.mubr.bf16.gmra.mrb[0].mxu0 %v1477
  %v1654 = vpop.f32.mrb[0].mxu0
  %v1655 = vadd.f32 %v1506, %v1654
  %v1656 = vpop.f32.mrb[0].mxu0
  %v1657 = vpop.f32.mrb[0].mxu0
  %v1658 = vadd.f32 %v1506, %v1657
  %v1659 = vpop.f32.mrb[0].mxu0
  %1660 = vmatprep.mubr.bf16.mxu0 0
  %1661 = vmatmul.mubr.bf16.gmra.mrb[0].mxu0 %v1478
  %v1662 = vpop.f32.mrb[0].mxu0
  %v1663 = vadd.f32 %v1506, %v1662
  %v1664 = vpop.f32.mrb[0].mxu0
  %v1665 = vpop.f32.mrb[0].mxu0
  %v1666 = vadd.f32 %v1506, %v1665
  %v1667 = vpop.f32.mrb[0].mxu0
  %1668 = vmatprep.mubr.bf16.mxu0 0
  %1669 = vmatmul.mubr.bf16.gmra.mrb[0].mxu0 %v1479
  %v1670 = vpop.f32.mrb[0].mxu0
  %v1671 = vadd.f32 %v1506, %v1670
  %v1672 = vpop.f32.mrb[0].mxu0
  %v1673 = vpop.f32.mrb[0].mxu0
  %v1674 = vadd.f32 %v1506, %v1673
  %v1675 = vpop.f32.mrb[0].mxu0
  %1676 = vmatprep.mubr.bf16.mxu0 0
  %1677 = vmatmul.mubr.bf16.gmra.mrb[0].mxu0 %v1480
  %v1678 = vpop.f32.mrb[0].mxu0
  %v1679 = vadd.f32 %v1506, %v1678
  %v1680 = vpop.f32.mrb[0].mxu0
  %v1681 = vpop.f32.mrb[0].mxu0
  %v1682 = vadd.f32 %v1506, %v1681
  %v1683 = vpop.f32.mrb[0].mxu0
  %1684 = vmatprep.mubr.bf16.mxu0 0
  %1685 = vmatmul.mubr.bf16.gmra.mrb[0].mxu0 %v1481
  %v1686 = vpop.f32.mrb[0].mxu0
  %v1687 = vadd.f32 %v1506, %v1686
  %v1688 = vpop.f32.mrb[0].mxu0
  %v1689 = vpop.f32.mrb[0].mxu0
  %v1690 = vadd.f32 %v1506, %v1689
  %v1691 = vpop.f32.mrb[0].mxu0
  %1692 = vmatprep.mubr.bf16.mxu0 0
  %1693 = vmatmul.mubr.bf16.gmra.mrb[0].mxu0 %v1482
  %v1694 = vpop.f32.mrb[0].mxu0
  %v1695 = vadd.f32 %v1506, %v1694
  %v1696 = vpop.f32.mrb[0].mxu0
  %v1697 = vpop.f32.mrb[0].mxu0
  %v1698 = vadd.f32 %v1506, %v1697
  %v1699 = vpop.f32.mrb[0].mxu0
  %1700 = vmatprep.mubr.bf16.mxu0 0
  %1701 = vmatmul.mubr.bf16.gmra.mrb[0].mxu0 %v1483
  %v1702 = vpop.f32.mrb[0].mxu0
  %v1703 = vadd.f32 %v1506, %v1702
  %v1704 = vpop.f32.mrb[0].mxu0
  %v1705 = vpop.f32.mrb[0].mxu0
  %v1706 = vadd.f32 %v1506, %v1705
  %v1707 = vpop.f32.mrb[0].mxu0
  %1708 = vmatprep.mubr.bf16.mxu0 0
  %1709 = vmatmul.mubr.bf16.gmra.mrb[0].mxu0 %v1484
  %v1710 = vpop.f32.mrb[0].mxu0
  %v1711 = vadd.f32 %v1506, %v1710
  %v1712 = vpop.f32.mrb[0].mxu0
  %v1713 = vpop.f32.mrb[0].mxu0
  %v1714 = vadd.f32 %v1506, %v1713
  %v1715 = vpop.f32.mrb[0].mxu0
  %1716 = vdwg.mxu0
  %1717 = vst [vmem:[%s13] sm:$0xff] %v1591
  %1718 = vst [vmem:[%s13 + $0x8] sm:$0xff] %v1594
  %1719 = vst [vmem:[%s13 + $0x10] sm:$0xff] %v1599
  %1720 = vst [vmem:[%s13 + $0x18] sm:$0xff] %v1602
  %1721 = vst [vmem:[%s13 + $0x20] sm:$0xff] %v1607
  %1722 = vst [vmem:[%s13 + $0x28] sm:$0xff] %v1610
  %1723 = vst [vmem:[%s13 + $0x30] sm:$0xff] %v1615
  %1724 = vst [vmem:[%s13 + $0x38] sm:$0xff] %v1618
  %1725 = vst [vmem:[%s13 + $0x40] sm:$0xff] %v1623
  %1726 = vst [vmem:[%s13 + $0x48] sm:$0xff] %v1626
  %1727 = vst [vmem:[%s13 + $0x50] sm:$0xff] %v1631
  %1728 = vst [vmem:[%s13 + $0x58] sm:$0xff] %v1634
  %1729 = vst [vmem:[%s13 + $0x60] sm:$0xff] %v1639
  %1730 = vst [vmem:[%s13 + $0x68] sm:$0xff] %v1642
  %1731 = vst [vmem:[%s13 + $0x70] sm:$0xff] %v1647
  %1732 = vst [vmem:[%s13 + $0x78] sm:$0xff] %v1650
  %1733 = vst [vmem:[%s13 + $0x80] sm:$0xff] %v1655
  %1734 = vst [vmem:[%s13 + $0x88] sm:$0xff] %v1658
  %1735 = vst [vmem:[%s13 + $0x90] sm:$0xff] %v1663
  %1736 = vst [vmem:[%s13 + $0x98] sm:$0xff] %v1666
  %1737 = vst [vmem:[%s13 + $0xa0] sm:$0xff] %v1671
  %1738 = vst [vmem:[%s13 + $0xa8] sm:$0xff] %v1674
  %1739 = vst [vmem:[%s13 + $0xb0] sm:$0xff] %v1679
  %1740 = vst [vmem:[%s13 + $0xb8] sm:$0xff] %v1682
  %1741 = vst [vmem:[%s13 + $0xc0] sm:$0xff] %v1687
  %1742 = vst [vmem:[%s13 + $0xc8] sm:$0xff] %v1690
  %1743 = vst [vmem:[%s13 + $0xd0] sm:$0xff] %v1695
  %1744 = vst [vmem:[%s13 + $0xd8] sm:$0xff] %v1698
  %1745 = vst [vmem:[%s13 + $0xe0] sm:$0xff] %v1703
  %1746 = vst [vmem:[%s13 + $0xe8] sm:$0xff] %v1706
  %1747 = vst [vmem:[%s13 + $0xf0] sm:$0xff] %v1711
  %1748 = vst [vmem:[%s13 + $0xf8] sm:$0xff] %v1714
  %v1749 = vpack.c.bf16 %v1594, %v1591
  %v1750 = vpack.c.bf16 %v1602, %v1599
  %v1751 = vpack.c.bf16 %v1610, %v1607
  %v1752 = vpack.c.bf16 %v1618, %v1615
  %v1753 = vpack.c.bf16 %v1626, %v1623
  %v1754 = vpack.c.bf16 %v1634, %v1631
  %v1755 = vpack.c.bf16 %v1642, %v1639
  %v1756 = vpack.c.bf16 %v1650, %v1647
  %v1757 = vpack.c.bf16 %v1658, %v1655
  %v1758 = vpack.c.bf16 %v1666, %v1663
  %v1759 = vpack.c.bf16 %v1674, %v1671
  %v1760 = vpack.c.bf16 %v1682, %v1679
  %v1761 = vpack.c.bf16 %v1690, %v1687
  %v1762 = vpack.c.bf16 %v1698, %v1695
  %v1763 = vpack.c.bf16 %v1706, %v1703
  %v1764 = vpack.c.bf16 %v1714, %v1711
  %v1765 = vld [vmem:[%s9] sm:$0xf]
  %v1766 = vld [vmem:[%s9 + $0x4] sm:$0xf]
  %v1767 = vld [vmem:[%s9 + $0x8] sm:$0xf]
  %v1768 = vld [vmem:[%s9 + $0xc] sm:$0xf]
  %v1769 = vld [vmem:[%s9 + $0x10] sm:$0xf]
  %v1770 = vld [vmem:[%s9 + $0x14] sm:$0xf]
  %v1771 = vld [vmem:[%s9 + $0x18] sm:$0xf]
  %v1772 = vld [vmem:[%s9 + $0x1c] sm:$0xf]
  %v1773 = vld [vmem:[%s9 + $0x20] sm:$0xf]
  %v1774 = vld [vmem:[%s9 + $0x24] sm:$0xf]
  %v1775 = vld [vmem:[%s9 + $0x28] sm:$0xf]
  %v1776 = vld [vmem:[%s9 + $0x2c] sm:$0xf]
  %v1777 = vld [vmem:[%s9 + $0x30] sm:$0xf]
  %v1778 = vld [vmem:[%s9 + $0x34] sm:$0xf]
  %v1779 = vld [vmem:[%s9 + $0x38] sm:$0xf]
  %v1780 = vld [vmem:[%s9 + $0x3c] sm:$0xf]
  %v1781 = vld [vmem:[%s10] sm:$0x1]
  %v1783 = vlaneseq
  %v1784 = vshrl.u32 %v1783, 7
  %v1785 = vsub.s32 0, %v1784
  %v1786 = vrot.slane %v1781, %v1785
  %v1804 = vunpack.c.l.b16 %v1765
  %v1805 = vunpack.c.l.b16 %v1766
  %v1806 = vunpack.c.l.b16 %v1767
  %v1807 = vunpack.c.l.b16 %v1768
  %v1808 = vunpack.c.l.b16 %v1769
  %v1809 = vunpack.c.l.b16 %v1770
  %v1810 = vunpack.c.l.b16 %v1771
  %v1811 = vunpack.c.l.b16 %v1772
  %v1812 = vunpack.c.l.b16 %v1773
  %v1813 = vunpack.c.l.b16 %v1774
  %v1814 = vunpack.c.l.b16 %v1775
  %v1815 = vunpack.c.l.b16 %v1776
  %v1816 = vunpack.c.l.b16 %v1777
  %v1817 = vunpack.c.l.b16 %v1778
  %v1818 = vunpack.c.l.b16 %v1779
  %v1819 = vunpack.c.l.b16 %v1780
  %v1820 = vpack.c.b16 %v1805, %v1804
  %v1821 = vpack.c.b16 %v1807, %v1806
  %v1822 = vpack.c.b16 %v1809, %v1808
  %v1823 = vpack.c.b16 %v1811, %v1810
  %v1824 = vpack.c.b16 %v1813, %v1812
  %v1825 = vpack.c.b16 %v1815, %v1814
  %v1826 = vpack.c.b16 %v1817, %v1816
  %v1827 = vpack.c.b16 %v1819, %v1818
  %1836 = vmatprep.subr.bf16.mxu0 0
  %1837 = vmatpush1.bf16.msra.mxu0 %v1820
  %1838 = vmatprep.subr.bf16.mxu0 0
  %1839 = vmatpush1.bf16.msra.mxu0 %v1821
  %1840 = vmatprep.subr.bf16.mxu0 0
  %1841 = vmatpush1.bf16.msra.mxu0 %v1822
  %1842 = vmatprep.subr.bf16.mxu0 0
  %1843 = vmatpush1.bf16.msra.mxu0 %v1823
  %1844 = vmatprep.subr.bf16.mxu0 0
  %1845 = vmatpush1.bf16.msra.mxu0 %v1824
  %1846 = vmatprep.subr.bf16.mxu0 0
  %1847 = vmatpush1.bf16.msra.mxu0 %v1825
  %1848 = vmatprep.subr.bf16.mxu0 0
  %1849 = vmatpush1.bf16.msra.mxu0 %v1826
  %1850 = vmatprep.subr.bf16.mxu0 0
  %1851 = vmatpush1.bf16.msra.mxu0 %v1827
  %1852 = vmatprep.subr.bf16.mxu0 0
  %1853 = vmatpush1.bf16.msra.mxu0 0
  %1854 = vmatprep.subr.bf16.mxu0 0
  %1855 = vmatpush1.bf16.msra.mxu0 0
  %1856 = vmatprep.subr.bf16.mxu0 0
  %1857 = vmatpush1.bf16.msra.mxu0 0
  %1858 = vmatprep.subr.bf16.mxu0 0
  %1859 = vmatpush1.bf16.msra.mxu0 0
  %1860 = vmatprep.subr.bf16.mxu0 0
  %1861 = vmatpush1.bf16.msra.mxu0 0
  %1862 = vmatprep.subr.bf16.mxu0 0
  %1863 = vmatpush1.bf16.msra.mxu0 0
  %1864 = vmatprep.subr.bf16.mxu0 0
  %1865 = vmatpush1.bf16.msra.mxu0 0
  %1866 = vmatprep.subr.bf16.mxu0 0
  %1867 = vmatpush1.bf16.msra.mxu0 0
  %1868 = vmatprep.mubr.bf16.mxu0 0
  %1869 = vmatmul.mubr.bf16.gmra.mrb[0].mxu0 %v1749
  %v1870 = vpop.f32.mrb[0].mxu0
  %v1871 = vadd.f32 %v1786, %v1870
  %v1872 = vpop.f32.mrb[0].mxu0
  %v1873 = vpop.f32.mrb[0].mxu0
  %v1874 = vadd.f32 %v1786, %v1873
  %v1875 = vpop.f32.mrb[0].mxu0
  %1876 = vmatprep.mubr.bf16.mxu0 0
  %1877 = vmatmul.mubr.bf16.gmra.mrb[0].mxu0 %v1750
  %v1878 = vpop.f32.mrb[0].mxu0
  %v1879 = vadd.f32 %v1786, %v1878
  %v1880 = vpop.f32.mrb[0].mxu0
  %v1881 = vpop.f32.mrb[0].mxu0
  %v1882 = vadd.f32 %v1786, %v1881
  %v1883 = vpop.f32.mrb[0].mxu0
  %1884 = vmatprep.mubr.bf16.mxu0 0
  %1885 = vmatmul.mubr.bf16.gmra.mrb[0].mxu0 %v1751
  %v1886 = vpop.f32.mrb[0].mxu0
  %v1887 = vadd.f32 %v1786, %v1886
  %v1888 = vpop.f32.mrb[0].mxu0
  %v1889 = vpop.f32.mrb[0].mxu0
  %v1890 = vadd.f32 %v1786, %v1889
  %v1891 = vpop.f32.mrb[0].mxu0
  %1892 = vmatprep.mubr.bf16.mxu0 0
  %1893 = vmatmul.mubr.bf16.gmra.mrb[0].mxu0 %v1752
  %v1894 = vpop.f32.mrb[0].mxu0
  %v1895 = vadd.f32 %v1786, %v1894
  %v1896 = vpop.f32.mrb[0].mxu0
  %v1897 = vpop.f32.mrb[0].mxu0
  %v1898 = vadd.f32 %v1786, %v1897
  %v1899 = vpop.f32.mrb[0].mxu0
  %1900 = vmatprep.mubr.bf16.mxu0 0
  %1901 = vmatmul.mubr.bf16.gmra.mrb[0].mxu0 %v1753
  %v1902 = vpop.f32.mrb[0].mxu0
  %v1903 = vadd.f32 %v1786, %v1902
  %v1904 = vpop.f32.mrb[0].mxu0
  %v1905 = vpop.f32.mrb[0].mxu0
  %v1906 = vadd.f32 %v1786, %v1905
  %v1907 = vpop.f32.mrb[0].mxu0
  %1908 = vmatprep.mubr.bf16.mxu0 0
  %1909 = vmatmul.mubr.bf16.gmra.mrb[0].mxu0 %v1754
  %v1910 = vpop.f32.mrb[0].mxu0
  %v1911 = vadd.f32 %v1786, %v1910
  %v1912 = vpop.f32.mrb[0].mxu0
  %v1913 = vpop.f32.mrb[0].mxu0
  %v1914 = vadd.f32 %v1786, %v1913
  %v1915 = vpop.f32.mrb[0].mxu0
  %1916 = vmatprep.mubr.bf16.mxu0 0
  %1917 = vmatmul.mubr.bf16.gmra.mrb[0].mxu0 %v1755
  %v1918 = vpop.f32.mrb[0].mxu0
  %v1919 = vadd.f32 %v1786, %v1918
  %v1920 = vpop.f32.mrb[0].mxu0
  %v1921 = vpop.f32.mrb[0].mxu0
  %v1922 = vadd.f32 %v1786, %v1921
  %v1923 = vpop.f32.mrb[0].mxu0
  %1924 = vmatprep.mubr.bf16.mxu0 0
  %1925 = vmatmul.mubr.bf16.gmra.mrb[0].mxu0 %v1756
  %v1926 = vpop.f32.mrb[0].mxu0
  %v1927 = vadd.f32 %v1786, %v1926
  %v1928 = vpop.f32.mrb[0].mxu0
  %v1929 = vpop.f32.mrb[0].mxu0
  %v1930 = vadd.f32 %v1786, %v1929
  %v1931 = vpop.f32.mrb[0].mxu0
  %1932 = vmatprep.mubr.bf16.mxu0 0
  %1933 = vmatmul.mubr.bf16.gmra.mrb[0].mxu0 %v1757
  %v1934 = vpop.f32.mrb[0].mxu0
  %v1935 = vadd.f32 %v1786, %v1934
  %v1936 = vpop.f32.mrb[0].mxu0
  %v1937 = vpop.f32.mrb[0].mxu0
  %v1938 = vadd.f32 %v1786, %v1937
  %v1939 = vpop.f32.mrb[0].mxu0
  %1940 = vmatprep.mubr.bf16.mxu0 0
  %1941 = vmatmul.mubr.bf16.gmra.mrb[0].mxu0 %v1758
  %v1942 = vpop.f32.mrb[0].mxu0
  %v1943 = vadd.f32 %v1786, %v1942
  %v1944 = vpop.f32.mrb[0].mxu0
  %v1945 = vpop.f32.mrb[0].mxu0
  %v1946 = vadd.f32 %v1786, %v1945
  %v1947 = vpop.f32.mrb[0].mxu0
  %1948 = vmatprep.mubr.bf16.mxu0 0
  %1949 = vmatmul.mubr.bf16.gmra.mrb[0].mxu0 %v1759
  %v1950 = vpop.f32.mrb[0].mxu0
  %v1951 = vadd.f32 %v1786, %v1950
  %v1952 = vpop.f32.mrb[0].mxu0
  %v1953 = vpop.f32.mrb[0].mxu0
  %v1954 = vadd.f32 %v1786, %v1953
  %v1955 = vpop.f32.mrb[0].mxu0
  %1956 = vmatprep.mubr.bf16.mxu0 0
  %1957 = vmatmul.mubr.bf16.gmra.mrb[0].mxu0 %v1760
  %v1958 = vpop.f32.mrb[0].mxu0
  %v1959 = vadd.f32 %v1786, %v1958
  %v1960 = vpop.f32.mrb[0].mxu0
  %v1961 = vpop.f32.mrb[0].mxu0
  %v1962 = vadd.f32 %v1786, %v1961
  %v1963 = vpop.f32.mrb[0].mxu0
  %1964 = vmatprep.mubr.bf16.mxu0 0
  %1965 = vmatmul.mubr.bf16.gmra.mrb[0].mxu0 %v1761
  %v1966 = vpop.f32.mrb[0].mxu0
  %v1967 = vadd.f32 %v1786, %v1966
  %v1968 = vpop.f32.mrb[0].mxu0
  %v1969 = vpop.f32.mrb[0].mxu0
  %v1970 = vadd.f32 %v1786, %v1969
  %v1971 = vpop.f32.mrb[0].mxu0
  %1972 = vmatprep.mubr.bf16.mxu0 0
  %1973 = vmatmul.mubr.bf16.gmra.mrb[0].mxu0 %v1762
  %v1974 = vpop.f32.mrb[0].mxu0
  %v1975 = vadd.f32 %v1786, %v1974
  %v1976 = vpop.f32.mrb[0].mxu0
  %v1977 = vpop.f32.mrb[0].mxu0
  %v1978 = vadd.f32 %v1786, %v1977
  %v1979 = vpop.f32.mrb[0].mxu0
  %1980 = vmatprep.mubr.bf16.mxu0 0
  %1981 = vmatmul.mubr.bf16.gmra.mrb[0].mxu0 %v1763
  %v1982 = vpop.f32.mrb[0].mxu0
  %v1983 = vadd.f32 %v1786, %v1982
  %v1984 = vpop.f32.mrb[0].mxu0
  %v1985 = vpop.f32.mrb[0].mxu0
  %v1986 = vadd.f32 %v1786, %v1985
  %v1987 = vpop.f32.mrb[0].mxu0
  %1988 = vmatprep.mubr.bf16.mxu0 0
  %1989 = vmatmul.mubr.bf16.gmra.mrb[0].mxu0 %v1764
  %v1990 = vpop.f32.mrb[0].mxu0
  %v1991 = vadd.f32 %v1786, %v1990
  %v1992 = vpop.f32.mrb[0].mxu0
  %v1993 = vpop.f32.mrb[0].mxu0
  %v1994 = vadd.f32 %v1786, %v1993
  %v1995 = vpop.f32.mrb[0].mxu0
  %1996 = vdwg.mxu0
  %1997 = vadd.xlane.f32.xlu0 %v1871
  %v1998 = vpop.xlane.xlu0 %1997
  %1999 = vadd.xlane.f32.xlu0 %v1874
  %v2000 = vpop.xlane.xlu0 %1999
  %2001 = vadd.xlane.f32.xlu0 %v1879
  %v2002 = vpop.xlane.xlu0 %2001
  %2003 = vadd.xlane.f32.xlu0 %v1882
  %v2004 = vpop.xlane.xlu0 %2003
  %2005 = vadd.xlane.f32.xlu0 %v1887
  %v2006 = vpop.xlane.xlu0 %2005
  %2007 = vadd.xlane.f32.xlu0 %v1890
  %v2008 = vpop.xlane.xlu0 %2007
  %2009 = vadd.xlane.f32.xlu0 %v1895
  %v2010 = vpop.xlane.xlu0 %2009
  %2011 = vadd.xlane.f32.xlu0 %v1898
  %v2012 = vpop.xlane.xlu0 %2011
  %2013 = vadd.xlane.f32.xlu0 %v1903
  %v2014 = vpop.xlane.xlu0 %2013
  %2015 = vadd.xlane.f32.xlu0 %v1906
  %v2016 = vpop.xlane.xlu0 %2015
  %2017 = vadd.xlane.f32.xlu0 %v1911
  %v2018 = vpop.xlane.xlu0 %2017
  %2019 = vadd.xlane.f32.xlu0 %v1914
  %v2020 = vpop.xlane.xlu0 %2019
  %2021 = vadd.xlane.f32.xlu0 %v1919
  %v2022 = vpop.xlane.xlu0 %2021
  %2023 = vadd.xlane.f32.xlu0 %v1922
  %v2024 = vpop.xlane.xlu0 %2023
  %2025 = vadd.xlane.f32.xlu0 %v1927
  %v2026 = vpop.xlane.xlu0 %2025
  %2027 = vadd.xlane.f32.xlu0 %v1930
  %v2028 = vpop.xlane.xlu0 %2027
  %2029 = vadd.xlane.f32.xlu0 %v1935
  %v2030 = vpop.xlane.xlu0 %2029
  %2031 = vadd.xlane.f32.xlu0 %v1938
  %v2032 = vpop.xlane.xlu0 %2031
  %2033 = vadd.xlane.f32.xlu0 %v1943
  %v2034 = vpop.xlane.xlu0 %2033
  %2035 = vadd.xlane.f32.xlu0 %v1946
  %v2036 = vpop.xlane.xlu0 %2035
  %2037 = vadd.xlane.f32.xlu0 %v1951
  %v2038 = vpop.xlane.xlu0 %2037
  %2039 = vadd.xlane.f32.xlu0 %v1954
  %v2040 = vpop.xlane.xlu0 %2039
  %2041 = vadd.xlane.f32.xlu0 %v1959
  %v2042 = vpop.xlane.xlu0 %2041
  %2043 = vadd.xlane.f32.xlu0 %v1962
  %v2044 = vpop.xlane.xlu0 %2043
  %2045 = vadd.xlane.f32.xlu0 %v1967
  %v2046 = vpop.xlane.xlu0 %2045
  %2047 = vadd.xlane.f32.xlu0 %v1970
  %v2048 = vpop.xlane.xlu0 %2047
  %2049 = vadd.xlane.f32.xlu0 %v1975
  %v2050 = vpop.xlane.xlu0 %2049
  %2051 = vadd.xlane.f32.xlu0 %v1978
  %v2052 = vpop.xlane.xlu0 %2051
  %2053 = vadd.xlane.f32.xlu0 %v1983
  %v2054 = vpop.xlane.xlu0 %2053
  %2055 = vadd.xlane.f32.xlu0 %v1986
  %v2056 = vpop.xlane.xlu0 %2055
  %2057 = vadd.xlane.f32.xlu0 %v1991
  %v2058 = vpop.xlane.xlu0 %2057
  %2059 = vadd.xlane.f32.xlu0 %v1994
  %v2060 = vpop.xlane.xlu0 %2059
  %v2061 = vmul.f32 %v1998, 0.015625
  %v2062 = vmul.f32 %v2000, 0.015625
  %v2063 = vmul.f32 %v2002, 0.015625
  %v2064 = vmul.f32 %v2004, 0.015625
  %v2065 = vmul.f32 %v2006, 0.015625
  %v2066 = vmul.f32 %v2008, 0.015625
  %v2067 = vmul.f32 %v2010, 0.015625
  %v2068 = vmul.f32 %v2012, 0.015625
  %v2069 = vmul.f32 %v2014, 0.015625
  %v2070 = vmul.f32 %v2016, 0.015625
  %v2071 = vmul.f32 %v2018, 0.015625
  %v2072 = vmul.f32 %v2020, 0.015625
  %v2073 = vmul.f32 %v2022, 0.015625
  %v2074 = vmul.f32 %v2024, 0.015625
  %v2075 = vmul.f32 %v2026, 0.015625
  %v2076 = vmul.f32 %v2028, 0.015625
  %v2077 = vmul.f32 %v2030, 0.015625
  %v2078 = vmul.f32 %v2032, 0.015625
  %v2079 = vmul.f32 %v2034, 0.015625
  %v2080 = vmul.f32 %v2036, 0.015625
  %v2081 = vmul.f32 %v2038, 0.015625
  %v2082 = vmul.f32 %v2040, 0.015625
  %v2083 = vmul.f32 %v2042, 0.015625
  %v2084 = vmul.f32 %v2044, 0.015625
  %v2085 = vmul.f32 %v2046, 0.015625
  %v2086 = vmul.f32 %v2048, 0.015625
  %v2087 = vmul.f32 %v2050, 0.015625
  %v2088 = vmul.f32 %v2052, 0.015625
  %v2089 = vmul.f32 %v2054, 0.015625
  %v2090 = vmul.f32 %v2056, 0.015625
  %v2091 = vmul.f32 %v2058, 0.015625
  %v2092 = vmul.f32 %v2060, 0.015625
  %v2093 = vmul.f32 %v1871, %v1871
  %v2094 = vmul.f32 %v1874, %v1874
  %v2095 = vmul.f32 %v1879, %v1879
  %v2096 = vmul.f32 %v1882, %v1882
  %v2097 = vmul.f32 %v1887, %v1887
  %v2098 = vmul.f32 %v1890, %v1890
  %v2099 = vmul.f32 %v1895, %v1895
  %v2100 = vmul.f32 %v1898, %v1898
  %v2101 = vmul.f32 %v1903, %v1903
  %v2102 = vmul.f32 %v1906, %v1906
  %v2103 = vmul.f32 %v1911, %v1911
  %v2104 = vmul.f32 %v1914, %v1914
  %v2105 = vmul.f32 %v1919, %v1919
  %v2106 = vmul.f32 %v1922, %v1922
  %v2107 = vmul.f32 %v1927, %v1927
  %v2108 = vmul.f32 %v1930, %v1930
  %v2109 = vmul.f32 %v1935, %v1935
  %v2110 = vmul.f32 %v1938, %v1938
  %v2111 = vmul.f32 %v1943, %v1943
  %v2112 = vmul.f32 %v1946, %v1946
  %v2113 = vmul.f32 %v1951, %v1951
  %v2114 = vmul.f32 %v1954, %v1954
  %v2115 = vmul.f32 %v1959, %v1959
  %v2116 = vmul.f32 %v1962, %v1962
  %v2117 = vmul.f32 %v1967, %v1967
  %v2118 = vmul.f32 %v1970, %v1970
  %v2119 = vmul.f32 %v1975, %v1975
  %v2120 = vmul.f32 %v1978, %v1978
  %v2121 = vmul.f32 %v1983, %v1983
  %v2122 = vmul.f32 %v1986, %v1986
  %v2123 = vmul.f32 %v1991, %v1991
  %v2124 = vmul.f32 %v1994, %v1994
  %2125 = vadd.xlane.f32.xlu0 %v2093
  %v2126 = vpop.xlane.xlu0 %2125
  %2127 = vadd.xlane.f32.xlu0 %v2094
  %v2128 = vpop.xlane.xlu0 %2127
  %2129 = vadd.xlane.f32.xlu0 %v2095
  %v2130 = vpop.xlane.xlu0 %2129
  %2131 = vadd.xlane.f32.xlu0 %v2096
  %v2132 = vpop.xlane.xlu0 %2131
  %2133 = vadd.xlane.f32.xlu0 %v2097
  %v2134 = vpop.xlane.xlu0 %2133
  %2135 = vadd.xlane.f32.xlu0 %v2098
  %v2136 = vpop.xlane.xlu0 %2135
  %2137 = vadd.xlane.f32.xlu0 %v2099
  %v2138 = vpop.xlane.xlu0 %2137
  %2139 = vadd.xlane.f32.xlu0 %v2100
  %v2140 = vpop.xlane.xlu0 %2139
  %2141 = vadd.xlane.f32.xlu0 %v2101
  %v2142 = vpop.xlane.xlu0 %2141
  %2143 = vadd.xlane.f32.xlu0 %v2102
  %v2144 = vpop.xlane.xlu0 %2143
  %2145 = vadd.xlane.f32.xlu0 %v2103
  %v2146 = vpop.xlane.xlu0 %2145
  %2147 = vadd.xlane.f32.xlu0 %v2104
  %v2148 = vpop.xlane.xlu0 %2147
  %2149 = vadd.xlane.f32.xlu0 %v2105
  %v2150 = vpop.xlane.xlu0 %2149
  %2151 = vadd.xlane.f32.xlu0 %v2106
  %v2152 = vpop.xlane.xlu0 %2151
  %2153 = vadd.xlane.f32.xlu0 %v2107
  %v2154 = vpop.xlane.xlu0 %2153
  %2155 = vadd.xlane.f32.xlu0 %v2108
  %v2156 = vpop.xlane.xlu0 %2155
  %2157 = vadd.xlane.f32.xlu0 %v2109
  %v2158 = vpop.xlane.xlu0 %2157
  %2159 = vadd.xlane.f32.xlu0 %v2110
  %v2160 = vpop.xlane.xlu0 %2159
  %2161 = vadd.xlane.f32.xlu0 %v2111
  %v2162 = vpop.xlane.xlu0 %2161
  %2163 = vadd.xlane.f32.xlu0 %v2112
  %v2164 = vpop.xlane.xlu0 %2163
  %2165 = vadd.xlane.f32.xlu0 %v2113
  %v2166 = vpop.xlane.xlu0 %2165
  %2167 = vadd.xlane.f32.xlu0 %v2114
  %v2168 = vpop.xlane.xlu0 %2167
  %2169 = vadd.xlane.f32.xlu0 %v2115
  %v2170 = vpop.xlane.xlu0 %2169
  %2171 = vadd.xlane.f32.xlu0 %v2116
  %v2172 = vpop.xlane.xlu0 %2171
  %2173 = vadd.xlane.f32.xlu0 %v2117
  %v2174 = vpop.xlane.xlu0 %2173
  %2175 = vadd.xlane.f32.xlu0 %v2118
  %v2176 = vpop.xlane.xlu0 %2175
  %2177 = vadd.xlane.f32.xlu0 %v2119
  %v2178 = vpop.xlane.xlu0 %2177
  %2179 = vadd.xlane.f32.xlu0 %v2120
  %v2180 = vpop.xlane.xlu0 %2179
  %2181 = vadd.xlane.f32.xlu0 %v2121
  %v2182 = vpop.xlane.xlu0 %2181
  %2183 = vadd.xlane.f32.xlu0 %v2122
  %v2184 = vpop.xlane.xlu0 %2183
  %2185 = vadd.xlane.f32.xlu0 %v2123
  %v2186 = vpop.xlane.xlu0 %2185
  %2187 = vadd.xlane.f32.xlu0 %v2124
  %v2188 = vpop.xlane.xlu0 %2187
  %v2189 = vmul.f32 %v2126, 0.015625
  %v2190 = vmul.f32 %v2128, 0.015625
  %v2191 = vmul.f32 %v2130, 0.015625
  %v2192 = vmul.f32 %v2132, 0.015625
  %v2193 = vmul.f32 %v2134, 0.015625
  %v2194 = vmul.f32 %v2136, 0.015625
  %v2195 = vmul.f32 %v2138, 0.015625
  %v2196 = vmul.f32 %v2140, 0.015625
  %v2197 = vmul.f32 %v2142, 0.015625
  %v2198 = vmul.f32 %v2144, 0.015625
  %v2199 = vmul.f32 %v2146, 0.015625
  %v2200 = vmul.f32 %v2148, 0.015625
  %v2201 = vmul.f32 %v2150, 0.015625
  %v2202 = vmul.f32 %v2152, 0.015625
  %v2203 = vmul.f32 %v2154, 0.015625
  %v2204 = vmul.f32 %v2156, 0.015625
  %v2205 = vmul.f32 %v2158, 0.015625
  %v2206 = vmul.f32 %v2160, 0.015625
  %v2207 = vmul.f32 %v2162, 0.015625
  %v2208 = vmul.f32 %v2164, 0.015625
  %v2209 = vmul.f32 %v2166, 0.015625
  %v2210 = vmul.f32 %v2168, 0.015625
  %v2211 = vmul.f32 %v2170, 0.015625
  %v2212 = vmul.f32 %v2172, 0.015625
  %v2213 = vmul.f32 %v2174, 0.015625
  %v2214 = vmul.f32 %v2176, 0.015625
  %v2215 = vmul.f32 %v2178, 0.015625
  %v2216 = vmul.f32 %v2180, 0.015625
  %v2217 = vmul.f32 %v2182, 0.015625
  %v2218 = vmul.f32 %v2184, 0.015625
  %v2219 = vmul.f32 %v2186, 0.015625
  %v2220 = vmul.f32 %v2188, 0.015625
  %v2221 = vmul.f32 %v2061, %v2061
  %v2222 = vmul.f32 %v2062, %v2062
  %v2223 = vmul.f32 %v2063, %v2063
  %v2224 = vmul.f32 %v2064, %v2064
  %v2225 = vmul.f32 %v2065, %v2065
  %v2226 = vmul.f32 %v2066, %v2066
  %v2227 = vmul.f32 %v2067, %v2067
  %v2228 = vmul.f32 %v2068, %v2068
  %v2229 = vmul.f32 %v2069, %v2069
  %v2230 = vmul.f32 %v2070, %v2070
  %v2231 = vmul.f32 %v2071, %v2071
  %v2232 = vmul.f32 %v2072, %v2072
  %v2233 = vmul.f32 %v2073, %v2073
  %v2234 = vmul.f32 %v2074, %v2074
  %v2235 = vmul.f32 %v2075, %v2075
  %v2236 = vmul.f32 %v2076, %v2076
  %v2237 = vmul.f32 %v2077, %v2077
  %v2238 = vmul.f32 %v2078, %v2078
  %v2239 = vmul.f32 %v2079, %v2079
  %v2240 = vmul.f32 %v2080, %v2080
  %v2241 = vmul.f32 %v2081, %v2081
  %v2242 = vmul.f32 %v2082, %v2082
  %v2243 = vmul.f32 %v2083, %v2083
  %v2244 = vmul.f32 %v2084, %v2084
  %v2245 = vmul.f32 %v2085, %v2085
  %v2246 = vmul.f32 %v2086, %v2086
  %v2247 = vmul.f32 %v2087, %v2087
  %v2248 = vmul.f32 %v2088, %v2088
  %v2249 = vmul.f32 %v2089, %v2089
  %v2250 = vmul.f32 %v2090, %v2090
  %v2251 = vmul.f32 %v2091, %v2091
  %v2252 = vmul.f32 %v2092, %v2092
  %v2253 = vsub.f32 %v2189, %v2221
  %v2254 = vsub.f32 %v2190, %v2222
  %v2255 = vsub.f32 %v2191, %v2223
  %v2256 = vsub.f32 %v2192, %v2224
  %v2257 = vsub.f32 %v2193, %v2225
  %v2258 = vsub.f32 %v2194, %v2226
  %v2259 = vsub.f32 %v2195, %v2227
  %v2260 = vsub.f32 %v2196, %v2228
  %v2261 = vsub.f32 %v2197, %v2229
  %v2262 = vsub.f32 %v2198, %v2230
  %v2263 = vsub.f32 %v2199, %v2231
  %v2264 = vsub.f32 %v2200, %v2232
  %v2265 = vsub.f32 %v2201, %v2233
  %v2266 = vsub.f32 %v2202, %v2234
  %v2267 = vsub.f32 %v2203, %v2235
  %v2268 = vsub.f32 %v2204, %v2236
  %v2269 = vsub.f32 %v2205, %v2237
  %v2270 = vsub.f32 %v2206, %v2238
  %v2271 = vsub.f32 %v2207, %v2239
  %v2272 = vsub.f32 %v2208, %v2240
  %v2273 = vsub.f32 %v2209, %v2241
  %v2274 = vsub.f32 %v2210, %v2242
  %v2275 = vsub.f32 %v2211, %v2243
  %v2276 = vsub.f32 %v2212, %v2244
  %v2277 = vsub.f32 %v2213, %v2245
  %v2278 = vsub.f32 %v2214, %v2246
  %v2279 = vsub.f32 %v2215, %v2247
  %v2280 = vsub.f32 %v2216, %v2248
  %v2281 = vsub.f32 %v2217, %v2249
  %v2282 = vsub.f32 %v2218, %v2250
  %v2283 = vsub.f32 %v2219, %v2251
  %v2284 = vsub.f32 %v2220, %v2252
  %v2285 = vmax.f32 %v2253, 0.0
  %v2286 = vmax.f32 %v2254, 0.0
  %v2287 = vmax.f32 %v2255, 0.0
  %v2288 = vmax.f32 %v2256, 0.0
  %v2289 = vmax.f32 %v2257, 0.0
  %v2290 = vmax.f32 %v2258, 0.0
  %v2291 = vmax.f32 %v2259, 0.0
  %v2292 = vmax.f32 %v2260, 0.0
  %v2293 = vmax.f32 %v2261, 0.0
  %v2294 = vmax.f32 %v2262, 0.0
  %v2295 = vmax.f32 %v2263, 0.0
  %v2296 = vmax.f32 %v2264, 0.0
  %v2297 = vmax.f32 %v2265, 0.0
  %v2298 = vmax.f32 %v2266, 0.0
  %v2299 = vmax.f32 %v2267, 0.0
  %v2300 = vmax.f32 %v2268, 0.0
  %v2301 = vmax.f32 %v2269, 0.0
  %v2302 = vmax.f32 %v2270, 0.0
  %v2303 = vmax.f32 %v2271, 0.0
  %v2304 = vmax.f32 %v2272, 0.0
  %v2305 = vmax.f32 %v2273, 0.0
  %v2306 = vmax.f32 %v2274, 0.0
  %v2307 = vmax.f32 %v2275, 0.0
  %v2308 = vmax.f32 %v2276, 0.0
  %v2309 = vmax.f32 %v2277, 0.0
  %v2310 = vmax.f32 %v2278, 0.0
  %v2311 = vmax.f32 %v2279, 0.0
  %v2312 = vmax.f32 %v2280, 0.0
  %v2313 = vmax.f32 %v2281, 0.0
  %v2314 = vmax.f32 %v2282, 0.0
  %v2315 = vmax.f32 %v2283, 0.0
  %v2316 = vmax.f32 %v2284, 0.0
  %v2317 = vsub.f32 %v1871, %v2061
  %v2318 = vsub.f32 %v1874, %v2062
  %v2319 = vsub.f32 %v1879, %v2063
  %v2320 = vsub.f32 %v1882, %v2064
  %v2321 = vsub.f32 %v1887, %v2065
  %v2322 = vsub.f32 %v1890, %v2066
  %v2323 = vsub.f32 %v1895, %v2067
  %v2324 = vsub.f32 %v1898, %v2068
  %v2325 = vsub.f32 %v1903, %v2069
  %v2326 = vsub.f32 %v1906, %v2070
  %v2327 = vsub.f32 %v1911, %v2071
  %v2328 = vsub.f32 %v1914, %v2072
  %v2329 = vsub.f32 %v1919, %v2073
  %v2330 = vsub.f32 %v1922, %v2074
  %v2331 = vsub.f32 %v1927, %v2075
  %v2332 = vsub.f32 %v1930, %v2076
  %v2333 = vsub.f32 %v1935, %v2077
  %v2334 = vsub.f32 %v1938, %v2078
  %v2335 = vsub.f32 %v1943, %v2079
  %v2336 = vsub.f32 %v1946, %v2080
  %v2337 = vsub.f32 %v1951, %v2081
  %v2338 = vsub.f32 %v1954, %v2082
  %v2339 = vsub.f32 %v1959, %v2083
  %v2340 = vsub.f32 %v1962, %v2084
  %v2341 = vsub.f32 %v1967, %v2085
  %v2342 = vsub.f32 %v1970, %v2086
  %v2343 = vsub.f32 %v1975, %v2087
  %v2344 = vsub.f32 %v1978, %v2088
  %v2345 = vsub.f32 %v1983, %v2089
  %v2346 = vsub.f32 %v1986, %v2090
  %v2347 = vsub.f32 %v1991, %v2091
  %v2348 = vsub.f32 %v1994, %v2092
  %v2349 = vadd.f32 %v2285, 1e-05
  %v2350 = vadd.f32 %v2286, 1e-05
  %v2351 = vadd.f32 %v2287, 1e-05
  %v2352 = vadd.f32 %v2288, 1e-05
  %v2353 = vadd.f32 %v2289, 1e-05
  %v2354 = vadd.f32 %v2290, 1e-05
  %v2355 = vadd.f32 %v2291, 1e-05
  %v2356 = vadd.f32 %v2292, 1e-05
  %v2357 = vadd.f32 %v2293, 1e-05
  %v2358 = vadd.f32 %v2294, 1e-05
  %v2359 = vadd.f32 %v2295, 1e-05
  %v2360 = vadd.f32 %v2296, 1e-05
  %v2361 = vadd.f32 %v2297, 1e-05
  %v2362 = vadd.f32 %v2298, 1e-05
  %v2363 = vadd.f32 %v2299, 1e-05
  %v2364 = vadd.f32 %v2300, 1e-05
  %v2365 = vadd.f32 %v2301, 1e-05
  %v2366 = vadd.f32 %v2302, 1e-05
  %v2367 = vadd.f32 %v2303, 1e-05
  %v2368 = vadd.f32 %v2304, 1e-05
  %v2369 = vadd.f32 %v2305, 1e-05
  %v2370 = vadd.f32 %v2306, 1e-05
  %v2371 = vadd.f32 %v2307, 1e-05
  %v2372 = vadd.f32 %v2308, 1e-05
  %v2373 = vadd.f32 %v2309, 1e-05
  %v2374 = vadd.f32 %v2310, 1e-05
  %v2375 = vadd.f32 %v2311, 1e-05
  %v2376 = vadd.f32 %v2312, 1e-05
  %v2377 = vadd.f32 %v2313, 1e-05
  %v2378 = vadd.f32 %v2314, 1e-05
  %v2379 = vadd.f32 %v2315, 1e-05
  %v2380 = vadd.f32 %v2316, 1e-05
  %v2381 = vrsqrt.pop %v2349
  %v2382 = vrsqrt.pop %v2350
  %v2383 = vrsqrt.pop %v2351
  %v2384 = vrsqrt.pop %v2352
  %v2385 = vrsqrt.pop %v2353
  %v2386 = vrsqrt.pop %v2354
  %v2387 = vrsqrt.pop %v2355
  %v2388 = vrsqrt.pop %v2356
  %v2389 = vrsqrt.pop %v2357
  %v2390 = vrsqrt.pop %v2358
  %v2391 = vrsqrt.pop %v2359
  %v2392 = vrsqrt.pop %v2360
  %v2393 = vrsqrt.pop %v2361
  %v2394 = vrsqrt.pop %v2362
  %v2395 = vrsqrt.pop %v2363
  %v2396 = vrsqrt.pop %v2364
  %v2397 = vrsqrt.pop %v2365
  %v2398 = vrsqrt.pop %v2366
  %v2399 = vrsqrt.pop %v2367
  %v2400 = vrsqrt.pop %v2368
  %v2401 = vrsqrt.pop %v2369
  %v2402 = vrsqrt.pop %v2370
  %v2403 = vrsqrt.pop %v2371
  %v2404 = vrsqrt.pop %v2372
  %v2405 = vrsqrt.pop %v2373
  %v2406 = vrsqrt.pop %v2374
  %v2407 = vrsqrt.pop %v2375
  %v2408 = vrsqrt.pop %v2376
  %v2409 = vrsqrt.pop %v2377
  %v2410 = vrsqrt.pop %v2378
  %v2411 = vrsqrt.pop %v2379
  %v2412 = vrsqrt.pop %v2380
  %v2413 = vmul.f32 %v2317, %v2381
  %v2414 = vmul.f32 %v2318, %v2382
  %v2415 = vmul.f32 %v2319, %v2383
  %v2416 = vmul.f32 %v2320, %v2384
  %v2417 = vmul.f32 %v2321, %v2385
  %v2418 = vmul.f32 %v2322, %v2386
  %v2419 = vmul.f32 %v2323, %v2387
  %v2420 = vmul.f32 %v2324, %v2388
  %v2421 = vmul.f32 %v2325, %v2389
  %v2422 = vmul.f32 %v2326, %v2390
  %v2423 = vmul.f32 %v2327, %v2391
  %v2424 = vmul.f32 %v2328, %v2392
  %v2425 = vmul.f32 %v2329, %v2393
  %v2426 = vmul.f32 %v2330, %v2394
  %v2427 = vmul.f32 %v2331, %v2395
  %v2428 = vmul.f32 %v2332, %v2396
  %v2429 = vmul.f32 %v2333, %v2397
  %v2430 = vmul.f32 %v2334, %v2398
  %v2431 = vmul.f32 %v2335, %v2399
  %v2432 = vmul.f32 %v2336, %v2400
  %v2433 = vmul.f32 %v2337, %v2401
  %v2434 = vmul.f32 %v2338, %v2402
  %v2435 = vmul.f32 %v2339, %v2403
  %v2436 = vmul.f32 %v2340, %v2404
  %v2437 = vmul.f32 %v2341, %v2405
  %v2438 = vmul.f32 %v2342, %v2406
  %v2439 = vmul.f32 %v2343, %v2407
  %v2440 = vmul.f32 %v2344, %v2408
  %v2441 = vmul.f32 %v2345, %v2409
  %v2442 = vmul.f32 %v2346, %v2410
  %v2443 = vmul.f32 %v2347, %v2411
  %v2444 = vmul.f32 %v2348, %v2412
  %v2445 = vld [vmem:[%s11] sm:$0x1]
  %v2447 = vlaneseq
  %v2448 = vshrl.u32 %v2447, 7
  %v2449 = vsub.s32 0, %v2448
  %v2450 = vrot.slane %v2445, %v2449
  %v2452 = vmul.f32 %v2413, %v2450
  %v2453 = vmul.f32 %v2414, %v2450
  %v2454 = vmul.f32 %v2415, %v2450
  %v2455 = vmul.f32 %v2416, %v2450
  %v2456 = vmul.f32 %v2417, %v2450
  %v2457 = vmul.f32 %v2418, %v2450
  %v2458 = vmul.f32 %v2419, %v2450
  %v2459 = vmul.f32 %v2420, %v2450
  %v2460 = vmul.f32 %v2421, %v2450
  %v2461 = vmul.f32 %v2422, %v2450
  %v2462 = vmul.f32 %v2423, %v2450
  %v2463 = vmul.f32 %v2424, %v2450
  %v2464 = vmul.f32 %v2425, %v2450
  %v2465 = vmul.f32 %v2426, %v2450
  %v2466 = vmul.f32 %v2427, %v2450
  %v2467 = vmul.f32 %v2428, %v2450
  %v2468 = vmul.f32 %v2429, %v2450
  %v2469 = vmul.f32 %v2430, %v2450
  %v2470 = vmul.f32 %v2431, %v2450
  %v2471 = vmul.f32 %v2432, %v2450
  %v2472 = vmul.f32 %v2433, %v2450
  %v2473 = vmul.f32 %v2434, %v2450
  %v2474 = vmul.f32 %v2435, %v2450
  %v2475 = vmul.f32 %v2436, %v2450
  %v2476 = vmul.f32 %v2437, %v2450
  %v2477 = vmul.f32 %v2438, %v2450
  %v2478 = vmul.f32 %v2439, %v2450
  %v2479 = vmul.f32 %v2440, %v2450
  %v2480 = vmul.f32 %v2441, %v2450
  %v2481 = vmul.f32 %v2442, %v2450
  %v2482 = vmul.f32 %v2443, %v2450
  %v2483 = vmul.f32 %v2444, %v2450
  %v2484 = vld [vmem:[%s12] sm:$0x1]
  %v2486 = vlaneseq
  %v2487 = vshrl.u32 %v2486, 7
  %v2488 = vsub.s32 0, %v2487
  %v2489 = vrot.slane %v2484, %v2488
  %v2491 = vadd.f32 %v2452, %v2489
  %v2492 = vadd.f32 %v2453, %v2489
  %v2493 = vadd.f32 %v2454, %v2489
  %v2494 = vadd.f32 %v2455, %v2489
  %v2495 = vadd.f32 %v2456, %v2489
  %v2496 = vadd.f32 %v2457, %v2489
  %v2497 = vadd.f32 %v2458, %v2489
  %v2498 = vadd.f32 %v2459, %v2489
  %v2499 = vadd.f32 %v2460, %v2489
  %v2500 = vadd.f32 %v2461, %v2489
  %v2501 = vadd.f32 %v2462, %v2489
  %v2502 = vadd.f32 %v2463, %v2489
  %v2503 = vadd.f32 %v2464, %v2489
  %v2504 = vadd.f32 %v2465, %v2489
  %v2505 = vadd.f32 %v2466, %v2489
  %v2506 = vadd.f32 %v2467, %v2489
  %v2507 = vadd.f32 %v2468, %v2489
  %v2508 = vadd.f32 %v2469, %v2489
  %v2509 = vadd.f32 %v2470, %v2489
  %v2510 = vadd.f32 %v2471, %v2489
  %v2511 = vadd.f32 %v2472, %v2489
  %v2512 = vadd.f32 %v2473, %v2489
  %v2513 = vadd.f32 %v2474, %v2489
  %v2514 = vadd.f32 %v2475, %v2489
  %v2515 = vadd.f32 %v2476, %v2489
  %v2516 = vadd.f32 %v2477, %v2489
  %v2517 = vadd.f32 %v2478, %v2489
  %v2518 = vadd.f32 %v2479, %v2489
  %v2519 = vadd.f32 %v2480, %v2489
  %v2520 = vadd.f32 %v2481, %v2489
  %v2521 = vadd.f32 %v2482, %v2489
  %v2522 = vadd.f32 %v2483, %v2489
  %2523 = vst [vmem:[%s14] sm:$0xff] %v2491
  %2524 = vst [vmem:[%s14 + $0x8] sm:$0xff] %v2492
  %2525 = vst [vmem:[%s14 + $0x10] sm:$0xff] %v2493
  %2526 = vst [vmem:[%s14 + $0x18] sm:$0xff] %v2494
  %2527 = vst [vmem:[%s14 + $0x20] sm:$0xff] %v2495
  %2528 = vst [vmem:[%s14 + $0x28] sm:$0xff] %v2496
  %2529 = vst [vmem:[%s14 + $0x30] sm:$0xff] %v2497
  %2530 = vst [vmem:[%s14 + $0x38] sm:$0xff] %v2498
  %2531 = vst [vmem:[%s14 + $0x40] sm:$0xff] %v2499
  %2532 = vst [vmem:[%s14 + $0x48] sm:$0xff] %v2500
  %2533 = vst [vmem:[%s14 + $0x50] sm:$0xff] %v2501
  %2534 = vst [vmem:[%s14 + $0x58] sm:$0xff] %v2502
  %2535 = vst [vmem:[%s14 + $0x60] sm:$0xff] %v2503
  %2536 = vst [vmem:[%s14 + $0x68] sm:$0xff] %v2504
  %2537 = vst [vmem:[%s14 + $0x70] sm:$0xff] %v2505
  %2538 = vst [vmem:[%s14 + $0x78] sm:$0xff] %v2506
  %2539 = vst [vmem:[%s14 + $0x80] sm:$0xff] %v2507
  %2540 = vst [vmem:[%s14 + $0x88] sm:$0xff] %v2508
  %2541 = vst [vmem:[%s14 + $0x90] sm:$0xff] %v2509
  %2542 = vst [vmem:[%s14 + $0x98] sm:$0xff] %v2510
  %2543 = vst [vmem:[%s14 + $0xa0] sm:$0xff] %v2511
  %2544 = vst [vmem:[%s14 + $0xa8] sm:$0xff] %v2512
  %2545 = vst [vmem:[%s14 + $0xb0] sm:$0xff] %v2513
  %2546 = vst [vmem:[%s14 + $0xb8] sm:$0xff] %v2514
  %2547 = vst [vmem:[%s14 + $0xc0] sm:$0xff] %v2515
  %2548 = vst [vmem:[%s14 + $0xc8] sm:$0xff] %v2516
  %2549 = vst [vmem:[%s14 + $0xd0] sm:$0xff] %v2517
  %2550 = vst [vmem:[%s14 + $0xd8] sm:$0xff] %v2518
  %2551 = vst [vmem:[%s14 + $0xe0] sm:$0xff] %v2519
  %2552 = vst [vmem:[%s14 + $0xe8] sm:$0xff] %v2520
  %2553 = vst [vmem:[%s14 + $0xf0] sm:$0xff] %v2521
  %2554 = vst [vmem:[%s14 + $0xf8] sm:$0xff] %v2522
  // Predicated region
  $region54: #{patch_embed_conv_pallas.1} parent=0 // pred_check
    _
  $region55: #{patch_embed_conv_pallas.1} parent=0 // pred_check_branch
    %2556 = sbr.rel (0) target = $region57
  $region56: #{patch_embed_conv_pallas.1} parent=0 // pred_region
    _
  $region57: #{patch_embed_conv_pallas.1} parent=0 // pred_fallthru
    _
  // Predicated region
  $region58: #{patch_embed_conv_pallas.1} parent=0 // pred_check
    _
  $region59: #{patch_embed_conv_pallas.1} parent=0 // pred_check_branch
    %2558 = sbr.rel (0) target = $region61
  $region60: #{patch_embed_conv_pallas.1} parent=0 // pred_region
    _
  $region61: #{patch_embed_conv_pallas.1} parent=0 // pred_fallthru
    _
  // Predicated region
  $region62: #{patch_embed_conv_pallas.1} parent=0 // pred_check
    _
  $region63: #{patch_embed_conv_pallas.1} parent=0 // pred_check_branch
    %2560 = sbr.rel (0) target = $region65
  $region64: #{patch_embed_conv_pallas.1} parent=0 // pred_region
    _
  $region65: #{patch_embed_conv_pallas.1} parent=0 // pred_fallthru
    _
  // Predicated region
  $region66: #{patch_embed_conv_pallas.1} parent=0 // pred_check
    _
  $region67: #{patch_embed_conv_pallas.1} parent=0 // pred_check_branch
    %2562 = sbr.rel (0) target = $region69
  $region68: #{patch_embed_conv_pallas.1} parent=0 // pred_region
    _
  $region69: #{patch_embed_conv_pallas.1} parent=0 // pred_fallthru
    _

</llo_original>
